<compile_context>
chip_gen: v6e
topology: v6e:2x2x1
jax: 0.10.0
libtpu: 0.0.40
codegen_flags: <defaults>
</compile_context>

<pallas_src>
import numpy as np
import jax
import jax.numpy as jnp
from jax.experimental import pallas as pl
from jax.experimental.pallas import tpu as pltpu

# ----------------------------------------------------------------------------
# Config (EMB(num_spherical, num_radial, cutoff, envelope_exponent))
# ----------------------------------------------------------------------------
NUM_SPHERICAL = 3
NUM_RADIAL = 6
CUTOFF = 5.0
ENVELOPE_EXPONENT = 5
LANE_BLK = 256           # rows per grid step, on the lane axis

_N, _K = NUM_SPHERICAL, NUM_RADIAL
_NK = _N * _K
_NNK = _N * _N * _K

_P = ENVELOPE_EXPONENT + 1
_ENV_A = -(_P + 1) * (_P + 2) / 2.0
_ENV_B = float(_P * (_P + 2))
_ENV_C = -_P * (_P + 1) / 2.0


# ----------------------------------------------------------------------------
# Host-side (setup-time) basis tables — plays the role of sympy in __init__
# ----------------------------------------------------------------------------
def _spherical_jn(l, x):
    x = np.asarray(x, np.float64)
    j0 = np.sin(x) / x
    if l == 0:
        return j0
    j1 = np.sin(x) / x ** 2 - np.cos(x) / x
    if l == 1:
        return j1
    jm2, jm1 = j0, j1
    for ll in range(2, l + 1):
        jl = (2 * ll - 1) / x * jm1 - jm2
        jm2, jm1 = jm1, jl
    return jm1


def _bisect(f, a, b, iters=200):
    fa = f(a)
    for _ in range(iters):
        m = 0.5 * (a + b)
        fm = f(m)
        if fa * fm <= 0.0:
            b = m
        else:
            a, fa = m, fm
    return 0.5 * (a + b)


def _bessel_zeros(n, k):
    zeros = np.zeros((n, k), dtype=np.float64)
    zeros[0] = np.arange(1, k + 1) * np.pi
    points = np.arange(1, k + n) * np.pi
    racines = np.zeros(k + n - 1, dtype=np.float64)
    for i in range(1, n):
        for j in range(k + n - 1 - i):
            racines[j] = _bisect(lambda t: float(_spherical_jn(i, t)),
                                 points[j], points[j + 1])
        points = racines.copy()
        zeros[i, :k] = racines[:k]
    return zeros


_ZEROS = _bessel_zeros(NUM_SPHERICAL, NUM_RADIAL)            # (n, k)
_NORM = np.zeros_like(_ZEROS)
for _l in range(NUM_SPHERICAL):
    for _j in range(NUM_RADIAL):
        _NORM[_l, _j] = 1.0 / np.sqrt(0.5 * _spherical_jn(_l + 1, _ZEROS[_l, _j]) ** 2)

# Device-side constant tables, passed to pallas_call as tiny resident inputs.
#   FREQ_TAB : (K, 1)     — j*pi frequencies for dist_emb
#   Z_TAB    : (N, K, 1)  — Bessel zeros per order
#   N_TAB    : (N, K, 1)  — normalizers per order
_FREQ_TAB_NP = (np.arange(1, _K + 1) * np.pi).reshape(_K, 1).astype(np.float32)
_Z_TAB_NP = _ZEROS.reshape(_N, _K, 1).astype(np.float32)
_N_TAB_NP = _NORM.reshape(_N, _K, 1).astype(np.float32)


# ----------------------------------------------------------------------------
# Pallas kernels
# ----------------------------------------------------------------------------
def _recip(x):
    # EUP approximate reciprocal + one Newton step (keeps ~f32 accuracy).
    r = pl.reciprocal(x, approx=True)
    return r * (2.0 - x * r)


def _dist_emb_kernel(freq_ref, dist_ref, out_ref):
    d = dist_ref[...] * (1.0 / CUTOFF)            # (1, R)
    inv_d = _recip(d)
    d2 = d * d
    d4 = d2 * d2
    d_p0 = d4 * d                                 # d^(p-1) = d^5
    d_p1 = d_p0 * d
    d_p2 = d_p1 * d
    env = inv_d + _ENV_A * d_p0 + _ENV_B * d_p1 + _ENV_C * d_p2   # (1, R)
    out_ref[...] = env * jnp.sin(freq_ref[...] * d)   # (K,1)*(1,R) -> (K,R)


def _angle_torsion_kernel(z_ref, n_ref, dkj_ref, ang_ref, tor_ref,
                          ang_out_ref, tor_out_ref):
    z_tab = z_ref[...]                            # (N, K, 1)
    n_tab = n_ref[...]                            # (N, K, 1)
    x = dkj_ref[...] * (1.0 / CUTOFF)             # (1, R) gathered dist
    theta = ang_ref[...]                          # (1, R)
    phi = tor_ref[...]                            # (1, R)

    ct = jnp.cos(theta)
    st = jnp.sin(theta)
    cp = jnp.cos(phi)
    sp = jnp.sin(phi)

    # Real spherical harmonics (sympy-generated forms, incl. Condon-Shortley),
    # flat index q = a*NUM_SPHERICAL + b, matching the torch view/reshape.
    # TODO(synk): harmonics hardcoded for num_spherical == 3.
    y00 = jnp.full_like(theta, 0.28209479177387814)
    y10 = 0.4886025119029199 * ct
    y11 = -0.4886025119029199 * st * cp
    y1m1 = -0.4886025119029199 * st * sp
    y20 = 0.31539156525252005 * (3.0 * ct * ct - 1.0)
    y21 = -1.0925484305920792 * st * ct * cp
    y22 = 0.5462742152960396 * st * st * (cp * cp - sp * sp)
    y2m2 = 0.5462742152960396 * st * st * (2.0 * sp * cp)
    y2m1 = -1.0925484305920792 * st * ct * sp
    ys = (y00, y10, y11, y1m1, y20, y21, y22, y2m2, y2m1)
    zonal = (y00, y10, y20)                       # Y_l^0

    # Radial basis per order l, computed ONCE and reused by angle + all
    # torsion "a" blocks.  Column structure is static -> no select chains.
    ang_rows = [None] * _N
    tor_rows = [None] * (_N * _N)
    for l in range(_N):
        t = z_tab[l] * x                          # (K, 1)*(1, R) -> (K, R)
        s = jnp.sin(t)
        inv = _recip(t)
        j0 = s * inv
        if l == 0:
            jl = j0
        else:
            c = jnp.cos(t)
            j1 = s * inv * inv - c * inv
            jl = j1 if l == 1 else (3.0 * inv) * j1 - j0
        rbf_l = n_tab[l] * jl                     # (K, R)

        # angle: out[l*K + j] = rbf[l, j] * Y_l^0(theta)
        ang_rows[l] = zonal[l] * rbf_l
        # torsion: out[(a*N + l)*K + j] = Y_{a*N+l}(theta, phi) * rbf[l, j]
        for a in range(_N):
            q = a * _N + l
            tor_rows[q] = ys[q] * rbf_l

    ang_out_ref[...] = jnp.concatenate(ang_rows, axis=0)     # (NK,  R)
    tor_out_ref[...] = jnp.concatenate(tor_rows, axis=0)     # (NNK, R)


# ----------------------------------------------------------------------------
# Wrapper (EMB.forward)
# ----------------------------------------------------------------------------
def _round_up(n, m):
    return ((n + m - 1) // m) * m


def _pad1d(x, n, value):
    pad = n - x.shape[0]
    if pad == 0:
        return x
    return jnp.concatenate([x, jnp.full((pad,), value, x.dtype)])


def emb_forward(dist, angle, torsion, idx_kj):
    E = dist.shape[0]
    T = angle.shape[0]

    dist = dist.astype(jnp.float32)
    # glue: rbf[idx_kj] == rbf(dist[idx_kj]) since rbf is per-edge elementwise
    dkj = jnp.take(dist, idx_kj, axis=0)

    Ep = _round_up(E, LANE_BLK)
    Tp = _round_up(T, LANE_BLK)

    # pad rows to a lane-block multiple; padded dist rows use a safe value so
    # the 1/d envelope never produces inf/nan (padded outputs are sliced away)
    dist_p = _pad1d(dist, Ep, 0.5 * CUTOFF).reshape(1, Ep)
    dkj_p = _pad1d(dkj, Tp, 0.5 * CUTOFF).reshape(1, Tp)
    ang_p = _pad1d(angle.astype(jnp.float32), Tp, 0.0).reshape(1, Tp)
    tor_p = _pad1d(torsion.astype(jnp.float32), Tp, 0.0).reshape(1, Tp)

    freq_tab = jnp.asarray(_FREQ_TAB_NP)                      # (K, 1)
    z_tab = jnp.asarray(_Z_TAB_NP)                            # (N, K, 1)
    n_tab = jnp.asarray(_N_TAB_NP)                            # (N, K, 1)

    dist_emb_t = pl.pallas_call(
        _dist_emb_kernel,
        out_shape=jax.ShapeDtypeStruct((NUM_RADIAL, Ep), jnp.float32),
        grid=(Ep // LANE_BLK,),
        in_specs=[pl.BlockSpec((NUM_RADIAL, 1), lambda i: (0, 0)),
                  pl.BlockSpec((1, LANE_BLK), lambda i: (0, i))],
        out_specs=pl.BlockSpec((NUM_RADIAL, LANE_BLK), lambda i: (0, i)),
        compiler_params=pltpu.CompilerParams(dimension_semantics=("parallel",)),
    )(freq_tab, dist_p)

    ang_t, tor_t = pl.pallas_call(
        _angle_torsion_kernel,
        out_shape=(jax.ShapeDtypeStruct((_NK, Tp), jnp.float32),
                   jax.ShapeDtypeStruct((_NNK, Tp), jnp.float32)),
        grid=(Tp // LANE_BLK,),
        in_specs=[pl.BlockSpec((_N, _K, 1), lambda i: (0, 0, 0)),
                  pl.BlockSpec((_N, _K, 1), lambda i: (0, 0, 0)),
                  pl.BlockSpec((1, LANE_BLK), lambda i: (0, i)),
                  pl.BlockSpec((1, LANE_BLK), lambda i: (0, i)),
                  pl.BlockSpec((1, LANE_BLK), lambda i: (0, i))],
        out_specs=(pl.BlockSpec((_NK, LANE_BLK), lambda i: (0, i)),
                   pl.BlockSpec((_NNK, LANE_BLK), lambda i: (0, i))),
        compiler_params=pltpu.CompilerParams(dimension_semantics=("parallel",)),
    )(z_tab, n_tab, dkj_p, ang_p, tor_p)

    # transpose back to the PyTorch (rows, features) layout and drop padding
    dist_emb = dist_emb_t.T[:E]
    angle_emb = ang_t.T[:T]
    torsion_emb = tor_t.T[:T]
    return dist_emb, angle_emb, torsion_emb


# ----------------------------------------------------------------------------
# Pure-numpy reference (same math as the torch module) for a sanity check
# ----------------------------------------------------------------------------
def emb_reference(dist, angle, torsion, idx_kj):
    dist = np.asarray(dist, np.float64)
    angle = np.asarray(angle, np.float64)
    torsion = np.asarray(torsion, np.float64)
    idx_kj = np.asarray(idx_kj)
    n, k = NUM_SPHERICAL, NUM_RADIAL

    d = dist[:, None] / CUTOFF
    p = ENVELOPE_EXPONENT + 1
    a = -(p + 1) * (p + 2) / 2.0
    b = p * (p + 2)
    c = -p * (p + 1) / 2.0
    env = 1.0 / d + a * d ** (p - 1) + b * d ** p + c * d ** (p + 1)
    dist_emb = env * np.sin(np.arange(1, k + 1) * np.pi * d)

    x = dist[idx_kj] / CUTOFF
    rbf = np.zeros((len(idx_kj), n * k))
    for l in range(n):
        for j in range(k):
            rbf[:, l * k + j] = _NORM[l, j] * _spherical_jn(l, _ZEROS[l, j] * x)

    th, ph = angle, torsion
    ct, st = np.cos(th), np.sin(th)
    cp, sp = np.cos(ph), np.sin(ph)
    Y = np.stack([np.full_like(th, 0.28209479177387814),
                  0.4886025119029199 * ct,
                  -0.4886025119029199 * st * cp,
                  -0.4886025119029199 * st * sp,
                  0.31539156525252005 * (3 * ct * ct - 1),
                  -1.0925484305920792 * st * ct * cp,
                  0.5462742152960396 * st * st * np.cos(2 * ph),
                  0.5462742152960396 * st * st * np.sin(2 * ph),
                  -1.0925484305920792 * st * ct * sp], axis=1)   # (T, n*n)
    cbf_angle = Y[:, [0, 1, 4]]                                  # zonal Y_l^0
    angle_emb = (rbf.reshape(-1, n, k) * cbf_angle[:, :, None]).reshape(-1, n * k)
    torsion_emb = (rbf.reshape(-1, 1, n, k) * Y.reshape(-1, n, n, 1)
                   ).reshape(-1, n * n * k)
    return dist_emb, angle_emb, torsion_emb


if __name__ == "__main__":
    key = jax.random.PRNGKey(0)
    k1, k2, k3, k4 = jax.random.split(key, 4)
    E, T = 512, 1024   # edges, triplets (grid gets >=2 steps per call)
    dist = jax.random.uniform(k1, (E,), jnp.float32, 0.5, CUTOFF - 0.1)
    angle = jax.random.uniform(k2, (T,), jnp.float32, 1e-2, float(np.pi) - 1e-2)
    torsion = jax.random.uniform(k3, (T,), jnp.float32, -float(np.pi), float(np.pi))
    idx_kj = jax.random.randint(k4, (T,), 0, E, jnp.int32)

    outs = jax.jit(emb_forward)(dist, angle, torsion, idx_kj)
    d_emb, a_emb, t_emb = jax.block_until_ready(outs)

    rd, ra, rt = emb_reference(np.asarray(dist), np.asarray(angle),
                               np.asarray(torsion), np.asarray(idx_kj))
    assert d_emb.shape == (E, NUM_RADIAL)
    assert a_emb.shape == (T, NUM_SPHERICAL * NUM_RADIAL)
    assert t_emb.shape == (T, NUM_SPHERICAL * NUM_SPHERICAL * NUM_RADIAL)
    assert np.allclose(np.asarray(d_emb), rd, atol=2e-3, rtol=2e-3)
    assert np.allclose(np.asarray(a_emb), ra, atol=2e-3, rtol=2e-3)
    assert np.allclose(np.asarray(t_emb), rt, atol=2e-3, rtol=2e-3)
    print("KERNEL_OK")
</pallas_src>

<mosaic_0001>
module attributes {stable_mosaic.version = 11 : i64} {
  func.func @_angle_torsion_kernel(%arg0: i32, %arg1: memref<3x6x1xf32, #tpu.memory_space<vmem>>, %arg2: memref<3x6x1xf32, #tpu.memory_space<vmem>>, %arg3: memref<1x256xf32, #tpu.memory_space<vmem>>, %arg4: memref<1x256xf32, #tpu.memory_space<vmem>>, %arg5: memref<1x256xf32, #tpu.memory_space<vmem>>, %arg6: memref<18x256xf32, #tpu.memory_space<vmem>>, %arg7: memref<54x256xf32, #tpu.memory_space<vmem>>) attributes {dimension_semantics = [#tpu.dimension_semantics<parallel>], iteration_bounds = array<i64: 4>, scalar_prefetch = 0 : i64, scratch_operands = 0 : i64, tpu.core_type = #tpu.core_type<tc>, window_params = [{pipeline_mode = #tpu.pipeline_mode<synchronous>, transform_indices = @transform_0, window_bounds = array<i64: 3, 6, 1>}, {pipeline_mode = #tpu.pipeline_mode<synchronous>, transform_indices = @transform_1, window_bounds = array<i64: 3, 6, 1>}, {transform_indices = @transform_2, window_bounds = array<i64: 1, 256>}, {transform_indices = @transform_3, window_bounds = array<i64: 1, 256>}, {transform_indices = @transform_4, window_bounds = array<i64: 1, 256>}, {transform_indices = @transform_5, window_bounds = array<i64: 18, 256>}, {transform_indices = @transform_6, window_bounds = array<i64: 54, 256>}]} {
    %c0 = arith.constant 0 : index
    %c0_0 = arith.constant 0 : index
    %c0_1 = arith.constant 0 : index
    %0 = vector.load %arg1[%c0, %c0_0, %c0_1] : memref<3x6x1xf32, #tpu.memory_space<vmem>>, vector<3x6x1xf32>
    %c0_2 = arith.constant 0 : index
    %c0_3 = arith.constant 0 : index
    %c0_4 = arith.constant 0 : index
    %1 = vector.load %arg2[%c0_2, %c0_3, %c0_4] : memref<3x6x1xf32, #tpu.memory_space<vmem>>, vector<3x6x1xf32>
    %c0_5 = arith.constant 0 : index
    %c0_6 = arith.constant 0 : index
    %2 = vector.load %arg3[%c0_5, %c0_6] : memref<1x256xf32, #tpu.memory_space<vmem>>, vector<1x256xf32>
    %cst = arith.constant 2.000000e-01 : f32
    %3 = vector.broadcast %cst : f32 to vector<1x256xf32>
    %4 = arith.mulf %2, %3 : vector<1x256xf32>
    %c0_7 = arith.constant 0 : index
    %c0_8 = arith.constant 0 : index
    %5 = vector.load %arg4[%c0_7, %c0_8] : memref<1x256xf32, #tpu.memory_space<vmem>>, vector<1x256xf32>
    %c0_9 = arith.constant 0 : index
    %c0_10 = arith.constant 0 : index
    %6 = vector.load %arg5[%c0_9, %c0_10] : memref<1x256xf32, #tpu.memory_space<vmem>>, vector<1x256xf32>
    %7 = math.cos %5 : vector<1x256xf32>
    %8 = math.sin %5 : vector<1x256xf32>
    %9 = math.cos %6 : vector<1x256xf32>
    %10 = math.sin %6 : vector<1x256xf32>
    %cst_11 = arith.constant 0.282094806 : f32
    %11 = vector.broadcast %cst_11 : f32 to vector<1x256xf32>
    %cst_12 = arith.constant 0.488602519 : f32
    %12 = vector.broadcast %cst_12 : f32 to vector<1x256xf32>
    %13 = arith.mulf %12, %7 : vector<1x256xf32>
    %cst_13 = arith.constant -0.488602519 : f32
    %14 = vector.broadcast %cst_13 : f32 to vector<1x256xf32>
    %15 = arith.mulf %14, %8 : vector<1x256xf32>
    %16 = arith.mulf %15, %9 : vector<1x256xf32>
    %cst_14 = arith.constant -0.488602519 : f32
    %17 = vector.broadcast %cst_14 : f32 to vector<1x256xf32>
    %18 = arith.mulf %17, %8 : vector<1x256xf32>
    %19 = arith.mulf %18, %10 : vector<1x256xf32>
    %cst_15 = arith.constant 3.000000e+00 : f32
    %20 = vector.broadcast %cst_15 : f32 to vector<1x256xf32>
    %21 = arith.mulf %20, %7 : vector<1x256xf32>
    %22 = arith.mulf %21, %7 : vector<1x256xf32>
    %cst_16 = arith.constant 1.000000e+00 : f32
    %23 = vector.broadcast %cst_16 : f32 to vector<1x256xf32>
    %24 = arith.subf %22, %23 : vector<1x256xf32>
    %cst_17 = arith.constant 0.31539157 : f32
    %25 = vector.broadcast %cst_17 : f32 to vector<1x256xf32>
    %26 = arith.mulf %25, %24 : vector<1x256xf32>
    %cst_18 = arith.constant -1.09254849 : f32
    %27 = vector.broadcast %cst_18 : f32 to vector<1x256xf32>
    %28 = arith.mulf %27, %8 : vector<1x256xf32>
    %29 = arith.mulf %28, %7 : vector<1x256xf32>
    %30 = arith.mulf %29, %9 : vector<1x256xf32>
    %cst_19 = arith.constant 0.546274245 : f32
    %31 = vector.broadcast %cst_19 : f32 to vector<1x256xf32>
    %32 = arith.mulf %31, %8 : vector<1x256xf32>
    %33 = arith.mulf %32, %8 : vector<1x256xf32>
    %34 = arith.mulf %9, %9 : vector<1x256xf32>
    %35 = arith.mulf %10, %10 : vector<1x256xf32>
    %36 = arith.subf %34, %35 : vector<1x256xf32>
    %37 = arith.mulf %33, %36 : vector<1x256xf32>
    %cst_20 = arith.constant 0.546274245 : f32
    %38 = vector.broadcast %cst_20 : f32 to vector<1x256xf32>
    %39 = arith.mulf %38, %8 : vector<1x256xf32>
    %40 = arith.mulf %39, %8 : vector<1x256xf32>
    %cst_21 = arith.constant 2.000000e+00 : f32
    %41 = vector.broadcast %cst_21 : f32 to vector<1x256xf32>
    %42 = arith.mulf %41, %10 : vector<1x256xf32>
    %43 = arith.mulf %42, %9 : vector<1x256xf32>
    %44 = arith.mulf %40, %43 : vector<1x256xf32>
    %cst_22 = arith.constant -1.09254849 : f32
    %45 = vector.broadcast %cst_22 : f32 to vector<1x256xf32>
    %46 = arith.mulf %45, %8 : vector<1x256xf32>
    %47 = arith.mulf %46, %7 : vector<1x256xf32>
    %48 = arith.mulf %47, %10 : vector<1x256xf32>
    %49 = vector.extract_strided_slice %0 {offsets = [0, 0, 0], sizes = [1, 6, 1], strides = [1, 1, 1]} : vector<3x6x1xf32> to vector<1x6x1xf32>
    %50 = vector.shape_cast %49 : vector<1x6x1xf32> to vector<6x1xf32>
    %51 = vector.broadcast %50 : vector<6x1xf32> to vector<6x256xf32>
    %52 = vector.broadcast %4 : vector<1x256xf32> to vector<6x256xf32>
    %53 = arith.mulf %51, %52 : vector<6x256xf32>
    %54 = math.sin %53 : vector<6x256xf32>
    %55 = tpu.reciprocal %53 {approx = true} : vector<6x256xf32> -> vector<6x256xf32>
    %56 = arith.mulf %53, %55 : vector<6x256xf32>
    %cst_23 = arith.constant 2.000000e+00 : f32
    %57 = vector.broadcast %cst_23 : f32 to vector<6x256xf32>
    %58 = arith.subf %57, %56 : vector<6x256xf32>
    %59 = arith.mulf %55, %58 : vector<6x256xf32>
    %60 = arith.mulf %54, %59 : vector<6x256xf32>
    %61 = vector.extract_strided_slice %1 {offsets = [0, 0, 0], sizes = [1, 6, 1], strides = [1, 1, 1]} : vector<3x6x1xf32> to vector<1x6x1xf32>
    %62 = vector.shape_cast %61 : vector<1x6x1xf32> to vector<6x1xf32>
    %63 = vector.broadcast %62 : vector<6x1xf32> to vector<6x256xf32>
    %64 = arith.mulf %63, %60 : vector<6x256xf32>
    %65 = vector.broadcast %11 : vector<1x256xf32> to vector<6x256xf32>
    %66 = arith.mulf %65, %64 : vector<6x256xf32>
    %67 = vector.broadcast %11 : vector<1x256xf32> to vector<6x256xf32>
    %68 = arith.mulf %67, %64 : vector<6x256xf32>
    %69 = vector.broadcast %19 : vector<1x256xf32> to vector<6x256xf32>
    %70 = arith.mulf %69, %64 : vector<6x256xf32>
    %71 = vector.broadcast %37 : vector<1x256xf32> to vector<6x256xf32>
    %72 = arith.mulf %71, %64 : vector<6x256xf32>
    %73 = vector.extract_strided_slice %0 {offsets = [1, 0, 0], sizes = [1, 6, 1], strides = [1, 1, 1]} : vector<3x6x1xf32> to vector<1x6x1xf32>
    %74 = vector.shape_cast %73 : vector<1x6x1xf32> to vector<6x1xf32>
    %75 = vector.broadcast %74 : vector<6x1xf32> to vector<6x256xf32>
    %76 = vector.broadcast %4 : vector<1x256xf32> to vector<6x256xf32>
    %77 = arith.mulf %75, %76 : vector<6x256xf32>
    %78 = math.sin %77 : vector<6x256xf32>
    %79 = tpu.reciprocal %77 {approx = true} : vector<6x256xf32> -> vector<6x256xf32>
    %80 = arith.mulf %77, %79 : vector<6x256xf32>
    %cst_24 = arith.constant 2.000000e+00 : f32
    %81 = vector.broadcast %cst_24 : f32 to vector<6x256xf32>
    %82 = arith.subf %81, %80 : vector<6x256xf32>
    %83 = arith.mulf %79, %82 : vector<6x256xf32>
    %84 = math.cos %77 : vector<6x256xf32>
    %85 = arith.mulf %78, %83 : vector<6x256xf32>
    %86 = arith.mulf %85, %83 : vector<6x256xf32>
    %87 = arith.mulf %84, %83 : vector<6x256xf32>
    %88 = arith.subf %86, %87 : vector<6x256xf32>
    %89 = vector.extract_strided_slice %1 {offsets = [1, 0, 0], sizes = [1, 6, 1], strides = [1, 1, 1]} : vector<3x6x1xf32> to vector<1x6x1xf32>
    %90 = vector.shape_cast %89 : vector<1x6x1xf32> to vector<6x1xf32>
    %91 = vector.broadcast %90 : vector<6x1xf32> to vector<6x256xf32>
    %92 = arith.mulf %91, %88 : vector<6x256xf32>
    %93 = vector.broadcast %13 : vector<1x256xf32> to vector<6x256xf32>
    %94 = arith.mulf %93, %92 : vector<6x256xf32>
    %95 = vector.broadcast %13 : vector<1x256xf32> to vector<6x256xf32>
    %96 = arith.mulf %95, %92 : vector<6x256xf32>
    %97 = vector.broadcast %26 : vector<1x256xf32> to vector<6x256xf32>
    %98 = arith.mulf %97, %92 : vector<6x256xf32>
    %99 = vector.broadcast %44 : vector<1x256xf32> to vector<6x256xf32>
    %100 = arith.mulf %99, %92 : vector<6x256xf32>
    %101 = vector.extract_strided_slice %0 {offsets = [2, 0, 0], sizes = [1, 6, 1], strides = [1, 1, 1]} : vector<3x6x1xf32> to vector<1x6x1xf32>
    %102 = vector.shape_cast %101 : vector<1x6x1xf32> to vector<6x1xf32>
    %103 = vector.broadcast %102 : vector<6x1xf32> to vector<6x256xf32>
    %104 = vector.broadcast %4 : vector<1x256xf32> to vector<6x256xf32>
    %105 = arith.mulf %103, %104 : vector<6x256xf32>
    %106 = math.sin %105 : vector<6x256xf32>
    %107 = tpu.reciprocal %105 {approx = true} : vector<6x256xf32> -> vector<6x256xf32>
    %108 = arith.mulf %105, %107 : vector<6x256xf32>
    %cst_25 = arith.constant 2.000000e+00 : f32
    %109 = vector.broadcast %cst_25 : f32 to vector<6x256xf32>
    %110 = arith.subf %109, %108 : vector<6x256xf32>
    %111 = arith.mulf %107, %110 : vector<6x256xf32>
    %112 = arith.mulf %106, %111 : vector<6x256xf32>
    %113 = math.cos %105 : vector<6x256xf32>
    %114 = arith.mulf %106, %111 : vector<6x256xf32>
    %115 = arith.mulf %114, %111 : vector<6x256xf32>
    %116 = arith.mulf %113, %111 : vector<6x256xf32>
    %117 = arith.subf %115, %116 : vector<6x256xf32>
    %cst_26 = arith.constant 3.000000e+00 : f32
    %118 = vector.broadcast %cst_26 : f32 to vector<6x256xf32>
    %119 = arith.mulf %118, %111 : vector<6x256xf32>
    %120 = arith.mulf %119, %117 : vector<6x256xf32>
    %121 = arith.subf %120, %112 : vector<6x256xf32>
    %122 = vector.extract_strided_slice %1 {offsets = [2, 0, 0], sizes = [1, 6, 1], strides = [1, 1, 1]} : vector<3x6x1xf32> to vector<1x6x1xf32>
    %123 = vector.shape_cast %122 : vector<1x6x1xf32> to vector<6x1xf32>
    %124 = vector.broadcast %123 : vector<6x1xf32> to vector<6x256xf32>
    %125 = arith.mulf %124, %121 : vector<6x256xf32>
    %126 = vector.broadcast %26 : vector<1x256xf32> to vector<6x256xf32>
    %127 = arith.mulf %126, %125 : vector<6x256xf32>
    %128 = vector.broadcast %16 : vector<1x256xf32> to vector<6x256xf32>
    %129 = arith.mulf %128, %125 : vector<6x256xf32>
    %130 = vector.broadcast %30 : vector<1x256xf32> to vector<6x256xf32>
    %131 = arith.mulf %130, %125 : vector<6x256xf32>
    %132 = vector.broadcast %48 : vector<1x256xf32> to vector<6x256xf32>
    %133 = arith.mulf %132, %125 : vector<6x256xf32>
    %134 = tpu.concatenate %66, %94, %127 in 0 : vector<6x256xf32>, vector<6x256xf32>, vector<6x256xf32> -> vector<18x256xf32>
    %c0_27 = arith.constant 0 : index
    %c0_28 = arith.constant 0 : index
    %135 = vector.load %arg6[%c0_27, %c0_28] : memref<18x256xf32, #tpu.memory_space<vmem>>, vector<18x256xf32>
    tpu.vector_store %arg6[%c0_27, %c0_28], %134 {strides = array<i32>} : memref<18x256xf32, #tpu.memory_space<vmem>>, vector<18x256xf32>,
    %136 = tpu.concatenate %68, %96, %129, %70, %98, %131, %72, %100, %133 in 0 : vector<6x256xf32>, vector<6x256xf32>, vector<6x256xf32>, vector<6x256xf32>, vector<6x256xf32>, vector<6x256xf32>, vector<6x256xf32>, vector<6x256xf32>, vector<6x256xf32> -> vector<54x256xf32>
    %c0_29 = arith.constant 0 : index
    %c0_30 = arith.constant 0 : index
    %137 = vector.load %arg7[%c0_29, %c0_30] : memref<54x256xf32, #tpu.memory_space<vmem>>, vector<54x256xf32>
    tpu.vector_store %arg7[%c0_29, %c0_30], %136 {strides = array<i32>} : memref<54x256xf32, #tpu.memory_space<vmem>>, vector<54x256xf32>,
    return
  }
  func.func @transform_0(%arg0: i32) -> (i32, i32, i32) {
    %c0_i32 = arith.constant 0 : i32
    %c0_i32_0 = arith.constant 0 : i32
    %c0_i32_1 = arith.constant 0 : i32
    %c0_i32_2 = arith.constant 0 : i32
    return %c0_i32, %c0_i32_0, %c0_i32_1 : i32, i32, i32
  }
  func.func @transform_1(%arg0: i32) -> (i32, i32, i32) {
    %c0_i32 = arith.constant 0 : i32
    %c0_i32_0 = arith.constant 0 : i32
    %c0_i32_1 = arith.constant 0 : i32
    %c0_i32_2 = arith.constant 0 : i32
    return %c0_i32, %c0_i32_0, %c0_i32_1 : i32, i32, i32
  }
  func.func @transform_2(%arg0: i32) -> (i32, i32) {
    %c0_i32 = arith.constant 0 : i32
    %c0_i32_0 = arith.constant 0 : i32
    return %c0_i32, %arg0 : i32, i32
  }
  func.func @transform_3(%arg0: i32) -> (i32, i32) {
    %c0_i32 = arith.constant 0 : i32
    %c0_i32_0 = arith.constant 0 : i32
    return %c0_i32, %arg0 : i32, i32
  }
  func.func @transform_4(%arg0: i32) -> (i32, i32) {
    %c0_i32 = arith.constant 0 : i32
    %c0_i32_0 = arith.constant 0 : i32
    return %c0_i32, %arg0 : i32, i32
  }
  func.func @transform_5(%arg0: i32) -> (i32, i32) {
    %c0_i32 = arith.constant 0 : i32
    %c0_i32_0 = arith.constant 0 : i32
    return %c0_i32, %arg0 : i32, i32
  }
  func.func @transform_6(%arg0: i32) -> (i32, i32) {
    %c0_i32 = arith.constant 0 : i32
    %c0_i32_0 = arith.constant 0 : i32
    return %c0_i32, %arg0 : i32, i32
  }
}

module attributes {stable_mosaic.version = 11 : i64} {
  func.func @_dist_emb_kernel(%arg0: i32, %arg1: memref<6x1xf32, #tpu.memory_space<vmem>>, %arg2: memref<1x256xf32, #tpu.memory_space<vmem>>, %arg3: memref<6x256xf32, #tpu.memory_space<vmem>>) attributes {dimension_semantics = [#tpu.dimension_semantics<parallel>], iteration_bounds = array<i64: 2>, scalar_prefetch = 0 : i64, scratch_operands = 0 : i64, tpu.core_type = #tpu.core_type<tc>, window_params = [{pipeline_mode = #tpu.pipeline_mode<synchronous>, transform_indices = @transform_0, window_bounds = array<i64: 6, 1>}, {transform_indices = @transform_1, window_bounds = array<i64: 1, 256>}, {transform_indices = @transform_2, window_bounds = array<i64: 6, 256>}]} {
    %c0 = arith.constant 0 : index
    %c0_0 = arith.constant 0 : index
    %0 = vector.load %arg2[%c0, %c0_0] : memref<1x256xf32, #tpu.memory_space<vmem>>, vector<1x256xf32>
    %cst = arith.constant 2.000000e-01 : f32
    %1 = vector.broadcast %cst : f32 to vector<1x256xf32>
    %2 = arith.mulf %0, %1 : vector<1x256xf32>
    %3 = tpu.reciprocal %2 {approx = true} : vector<1x256xf32> -> vector<1x256xf32>
    %4 = arith.mulf %2, %3 : vector<1x256xf32>
    %cst_1 = arith.constant 2.000000e+00 : f32
    %5 = vector.broadcast %cst_1 : f32 to vector<1x256xf32>
    %6 = arith.subf %5, %4 : vector<1x256xf32>
    %7 = arith.mulf %3, %6 : vector<1x256xf32>
    %8 = arith.mulf %2, %2 : vector<1x256xf32>
    %9 = arith.mulf %8, %8 : vector<1x256xf32>
    %10 = arith.mulf %9, %2 : vector<1x256xf32>
    %11 = arith.mulf %10, %2 : vector<1x256xf32>
    %12 = arith.mulf %11, %2 : vector<1x256xf32>
    %cst_2 = arith.constant -2.800000e+01 : f32
    %13 = vector.broadcast %cst_2 : f32 to vector<1x256xf32>
    %14 = arith.mulf %13, %10 : vector<1x256xf32>
    %15 = arith.addf %7, %14 : vector<1x256xf32>
    %cst_3 = arith.constant 4.800000e+01 : f32
    %16 = vector.broadcast %cst_3 : f32 to vector<1x256xf32>
    %17 = arith.mulf %16, %11 : vector<1x256xf32>
    %18 = arith.addf %15, %17 : vector<1x256xf32>
    %cst_4 = arith.constant -2.100000e+01 : f32
    %19 = vector.broadcast %cst_4 : f32 to vector<1x256xf32>
    %20 = arith.mulf %19, %12 : vector<1x256xf32>
    %21 = arith.addf %18, %20 : vector<1x256xf32>
    %c0_5 = arith.constant 0 : index
    %c0_6 = arith.constant 0 : index
    %22 = vector.load %arg1[%c0_5, %c0_6] : memref<6x1xf32, #tpu.memory_space<vmem>>, vector<6x1xf32>
    %23 = vector.broadcast %22 : vector<6x1xf32> to vector<6x256xf32>
    %24 = vector.broadcast %2 : vector<1x256xf32> to vector<6x256xf32>
    %25 = arith.mulf %23, %24 : vector<6x256xf32>
    %26 = math.sin %25 : vector<6x256xf32>
    %27 = vector.broadcast %21 : vector<1x256xf32> to vector<6x256xf32>
    %28 = arith.mulf %27, %26 : vector<6x256xf32>
    %c0_7 = arith.constant 0 : index
    %c0_8 = arith.constant 0 : index
    %29 = vector.load %arg3[%c0_7, %c0_8] : memref<6x256xf32, #tpu.memory_space<vmem>>, vector<6x256xf32>
    tpu.vector_store %arg3[%c0_7, %c0_8], %28 {strides = array<i32>} : memref<6x256xf32, #tpu.memory_space<vmem>>, vector<6x256xf32>,
    return
  }
  func.func @transform_0(%arg0: i32) -> (i32, i32) {
    %c0_i32 = arith.constant 0 : i32
    %c0_i32_0 = arith.constant 0 : i32
    %c0_i32_1 = arith.constant 0 : i32
    return %c0_i32, %c0_i32_0 : i32, i32
  }
  func.func @transform_1(%arg0: i32) -> (i32, i32) {
    %c0_i32 = arith.constant 0 : i32
    %c0_i32_0 = arith.constant 0 : i32
    return %c0_i32, %arg0 : i32, i32
  }
  func.func @transform_2(%arg0: i32) -> (i32, i32) {
    %c0_i32 = arith.constant 0 : i32
    %c0_i32_0 = arith.constant 0 : i32
    return %c0_i32, %arg0 : i32, i32
  }
}

</mosaic_0001>

<llo_original>
// kernel: emb_forward.2
$region0: #{emb_forward.2}
  #allocation0 [shape = 'u32[]', space=smem, size = 0x4, offset = 0x4, fixed_abs, tag = 'smem constant byte address 0x4 - core index']
  #allocation1 [shape = 'u32[144,128]{1,0:T(1,128)}', space=vmem, size = 0x12000, scoped, tag = 'internal scratch']
  %s0 = inlined_call_operand.vmem [shape: f32[6,1], index: 0, kind: input, shape index: {}]
  %s1 = inlined_call_operand.vmem [shape: f32[1,512], index: 1, kind: input, shape index: {}]
  %s2 = inlined_call_operand.hbm [shape: f32[6,512], index: 2, kind: output, shape index: {}]
  %s3 = sld [smem:[#allocation0]]
  $region41: #{emb_forward.2} parent=0
    _
  %s5 = ssub.s32 1, %s3
  %s6 = scalar_select 0, %s5, %s3
  $region1: #{emb_forward.2} parent=0
    #allocation2 [shape = 'u8[16384]{0}', space=vmem, size = 0x4000, scoped, tag = 'output window, operand 0']
    #allocation3 [shape = 's32[2]{0}', space=sflag, size = 0x8, scoped, tag = 'scoped memory for emb_forward.2']
    %7 = vsyncpa [#allocation3], 0
    %s8 = scalar_lea.sflag [#allocation3], 1
    %9 = vsyncpa %s8, 0
    loop: start=0, step=1, limit=4
    $region2: #{emb_forward.2} parent=1 // loop_pre_header
      _
    $region3: #{emb_forward.2} parent=1 // loop_header
      %s11 = sphi 0, %s15
      %p12 = scmp.ge.s32.totalorder %s11, 4
      %s19 = sphi 0, %s19
      %s21 = sphi 0, %s19
      %s22 = sphi 0, %s21
      %s36 = sphi 0, %s22
      %s42 = sphi 0, %s44
      %s45 = sphi 0, %s42
      %s46 = sphi 0, %s45
      %s62 = sphi 0, %s46
      %s68 = sphi 0, %s70
      %s71 = sphi 0, %s68
      %s72 = sphi 0, %s71
      %s88 = sphi 0, %s72
    $region4: #{emb_forward.2} parent=1 // loop_header_branch
      %14 = sbr.rel (%p12) target = $region8
    $region5: #{emb_forward.2} parent=1 // loop_body
      %s16 = ssub.s32 %s11, 1
      %s17 = ssub.s32 %s11, 2
      %s18 = sadd.s32 %s11, 1
      %s20 = sadd.s32 %s19, 1
      %p23 = scmp.eq.s32.totalorder %s11, 1
      %p24 = scmp.ne.s32.totalorder %s19, %s21
      %p25 = scmp.eq.s32.totalorder %s11, 0
      %p26 = por %p24, %p25
      %p27 = scmp.ne.s32.totalorder %s19, %s21
      %p28 = scmp.eq.s32.totalorder %s16, 1
      %p29 = por %p27, %p28
      %p30 = scmp.ne.s32.totalorder %s21, %s22
      %p31 = scmp.eq.s32.totalorder %s16, 0
      %p32 = por %p30, %p31
      %p33 = scmp.ne.s32.totalorder %s21, %s22
      %p34 = scmp.eq.s32.totalorder %s17, 1
      %p35 = por %p33, %p34
      %p37 = scmp.ne.s32.totalorder %s22, %s36
      %p38 = scmp.eq.s32.totalorder %s17, 0
      %p39 = por %p37, %p38
      %s40 = ssub.s32 %s11, %s18
      %p41 = scmp.eq.s32.totalorder %s40, 0
      %s43 = sadd.s32 %s42, 1
      %s44 = scalar_select %p41, %s42, %s43
      %p47 = pneg %p41
      %p48 = scmp.eq.s32.totalorder %s11, 1
      %p49 = por %p47, %p48
      %p50 = scmp.ne.s32.totalorder %s42, %s45
      %p51 = scmp.eq.s32.totalorder %s11, 0
      %p52 = por %p50, %p51
      %p53 = scmp.ne.s32.totalorder %s42, %s45
      %p54 = scmp.eq.s32.totalorder %s16, 1
      %p55 = por %p53, %p54
      %p56 = scmp.ne.s32.totalorder %s45, %s46
      %p57 = scmp.eq.s32.totalorder %s16, 0
      %p58 = por %p56, %p57
      %p59 = scmp.ne.s32.totalorder %s45, %s46
      %p60 = scmp.eq.s32.totalorder %s17, 1
      %p61 = por %p59, %p60
      %p63 = scmp.ne.s32.totalorder %s46, %s62
      %p64 = scmp.eq.s32.totalorder %s17, 0
      %p65 = por %p63, %p64
      %s66 = ssub.s32 %s11, %s18
      %p67 = scmp.eq.s32.totalorder %s66, 0
      %s69 = sadd.s32 %s68, 1
      %s70 = scalar_select %p67, %s68, %s69
      %p73 = pneg %p67
      %p74 = scmp.eq.s32.totalorder %s11, 1
      %p75 = por %p73, %p74
      %p76 = scmp.ne.s32.totalorder %s68, %s71
      %p77 = scmp.eq.s32.totalorder %s11, 0
      %p78 = por %p76, %p77
      %p79 = scmp.ne.s32.totalorder %s68, %s71
      %p80 = scmp.eq.s32.totalorder %s16, 1
      %p81 = por %p79, %p80
      %p82 = scmp.ne.s32.totalorder %s71, %s72
      %p83 = scmp.eq.s32.totalorder %s16, 0
      %p84 = por %p82, %p83
      %p85 = scmp.ne.s32.totalorder %s71, %s72
      %p86 = scmp.eq.s32.totalorder %s17, 1
      %p87 = por %p85, %p86
      %p89 = scmp.ne.s32.totalorder %s72, %s88
      %p90 = scmp.eq.s32.totalorder %s17, 0
      %p91 = por %p89, %p90
      %p92 = scmp.le.s32.totalorder 1, %s11
      %p93 = scmp.lt.s32.totalorder %s11, 3
      %p94 = pnand %p92, %p93
      %p95 = pneg %p94
      // Predicated region
      $region9: #{emb_forward.2} parent=5 // pred_check
        _
      $region10: #{emb_forward.2} parent=5 // pred_check_branch
        %97 = sbr.rel (%p94) target = $region12
      $region11: #{emb_forward.2} parent=5 // pred_region
        %s98 = ssub.s32 %s11, 1
        // Predicated region
        $region13: #{emb_forward.2} parent=11 // pred_check
          %p99 = pneg %p32
        $region14: #{emb_forward.2} parent=11 // pred_check_branch
          %101 = sbr.rel (%p99) target = $region16
        $region15: #{emb_forward.2} parent=11 // pred_region
          _
        $region16: #{emb_forward.2} parent=11 // pred_fallthru
          _
      $region12: #{emb_forward.2} parent=5 // pred_fallthru
        _
      %p102 = scmp.lt.s32.totalorder %s11, 2
      // Predicated region
      $region17: #{emb_forward.2} parent=5 // pred_check
        %p103 = pneg %p102
      $region18: #{emb_forward.2} parent=5 // pred_check_branch
        %105 = sbr.rel (%p103) target = $region20
      $region19: #{emb_forward.2} parent=5 // pred_region
        // Predicated region
        $region21: #{emb_forward.2} parent=19 // pred_check
          %p106 = pneg %p52
        $region22: #{emb_forward.2} parent=19 // pred_check_branch
          %108 = sbr.rel (%p106) target = $region24
        $region23: #{emb_forward.2} parent=19 // pred_region
          %s109 = smul.u32 2, %s11
          %p110 = scmp.lt.s32.totalorder %s109, 3
          %s111 = scalar_select %p110, %s109, 3
          %s112 = scalar_lea.vmem %s1, %s111
          %s113 = smul.u32 2, %s11
        $region24: #{emb_forward.2} parent=19 // pred_fallthru
          _
      $region20: #{emb_forward.2} parent=5 // pred_fallthru
        _
      %p114 = scmp.le.s32.totalorder 1, %s11
      %p115 = scmp.lt.s32.totalorder %s11, 3
      %p116 = pnand %p114, %p115
      %p117 = pneg %p116
      // Predicated region
      $region25: #{emb_forward.2} parent=5 // pred_check
        _
      $region26: #{emb_forward.2} parent=5 // pred_check_branch
        %119 = sbr.rel (%p116) target = $region28
      $region27: #{emb_forward.2} parent=5 // pred_region
        %s120 = ssub.s32 %s11, 1
        %p121 = pneg %p32
        %p122 = pneg %p29
        %s123 = smul.u32 2, %s16
        %p124 = scmp.lt.s32.totalorder %s123, 3
        %s125 = scalar_select %p124, %s123, 3
        %s126 = scalar_lea.vmem %s1, %s125
        %p127 = pneg %p58
        %p128 = pneg %p55
        %p129 = pneg %p84
        %p130 = pneg %p81
        %s131 = sand.u32 %s71, 1
        %s132 = scalar_lea.sflag [#allocation3], %s131
        %s133 = sand.u32 %s71, 1
        %s134 = smul.addr %s133, 16
        %s135 = scalar_lea.vmem [#allocation2], %s134
        %s136 = smul.u32 2, %s16
        %p137 = scmp.lt.s32.totalorder %s136, 3
        %s138 = scalar_select %p137, %s136, 3
        %s139 = scalar_lea.vmem %s1, %s138
        %s140 = smul.u32 2, %s16
        %s141 = smul.u32 2, %s16
        %v142 = vld [vmem:[%s139] sm:$0x3]
        %v143 = vmul.f32 %v142, 0.2
        %v144 = vrcp.pop %v143
        %v145 = vmul.f32 %v143, %v144
        %v146 = vsub.f32 2.0, %v145
        %v147 = vmul.f32 %v144, %v146
        %v148 = vmul.f32 %v143, %v143
        %v149 = vmul.f32 %v148, %v148
        %v150 = vmul.f32 %v149, %v143
        %v151 = vmul.f32 %v150, %v143
        %v152 = vmul.f32 %v151, %v143
        %v153 = vmul.f32 %v150, -28.0
        %v154 = vadd.f32 %v147, %v153
        %v155 = vmul.f32 %v151, 48.0
        %v156 = vadd.f32 %v154, %v155
        %v157 = vmul.f32 %v152, -21.0
        %v158 = vadd.f32 %v156, %v157
        %v159 = vld [vmem:[%s0] sm:$0x3f]
        %161 = vset.pattern.permute.xlu0 0
        %162 = vperm.xlu0 %161, %v159
        %v163 = vpop.permute.xlu0 %162
        %v166 = vlaneseq
        %v167 = vshrl.u32 %v166, 7
        %v168 = vsub.s32 0, %v167
        %v169 = vrot.slane %v143, %v168
        %v170 = vlaneseq
        %v171 = vshrl.u32 %v170, 7
        %v172 = vsub.s32 1, %v171
        %v173 = vrot.slane %v143, %v172
        %v176 = vmul.f32 %v163, %v169
        %v177 = vmul.f32 %v163, %v173
        %v178 = vand.u32 2147483647, %v176
        %vm179 = vcmp.le.f32.partialorder %v178, 0.7853982
        %vm180 = vcmp.lt.s32.totalorder %v176, 0
        %v181 = vand.u32 %v176, 2139095040
        %v182 = vshrl.u32 %v181, 23
        %v183 = vsub.s32 %v182, 127
        %v184 = vand.u32 2147483647, %v176
        %v185 = vand.u32 %v184, 8388607
        %v186 = vor.u32 %v185, 8388608
        %v187 = vsub.s32 0, %v186
        %v188 = vadd.s32 %v183, 1
        %vm189 = vcmp.gt.s32.totalorder %v188, 0
        %v190 = vsel %vm189, %v188, 0
        %v191 = vshrl.u32 %v190, 5
        %v192 = vand.u32 %v190, 31
        %v193 = vsub.s32 32, %v192
        %v194 = vshrl.u32 683565275, %v193
        %v195 = vshll.u32 683565275, %v192
        %v196 = vshrl.u32 2475754826, %v193
        %v197 = vor.u32 %v195, %v196
        %v198 = vshll.u32 2475754826, %v192
        %v199 = vshrl.u32 2131351028, %v193
        %v200 = vor.u32 %v198, %v199
        %v201 = vshll.u32 2131351028, %v192
        %v202 = vshrl.u32 2102212464, %v193
        %v203 = vor.u32 %v201, %v202
        %v204 = vshll.u32 2102212464, %v192
        %v205 = vshrl.u32 920167782, %v193
        %v206 = vor.u32 %v204, %v205
        %v207 = vshll.u32 920167782, %v192
        %v208 = vshrl.u32 1326507024, %v193
        %v209 = vor.u32 %v207, %v208
        %vm210 = vcmp.lt.s32.totalorder %v191, 1
        %vm211 = vcmp.lt.s32.totalorder %v191, 2
        %vm212 = vcmp.lt.s32.totalorder %v191, 3
        %vm213 = vcmp.lt.s32.totalorder %v191, 4
        %v214 = vsel %vm210, %v194, %v197
        %v215 = vsel %vm213, %v203, 2102212464
        %v216 = vsel %vm212, %v200, %v215
        %v217 = vsel %vm211, %v214, %v216
        %v218 = vsel %vm210, %v197, %v200
        %v219 = vsel %vm213, %v206, 920167782
        %v220 = vsel %vm212, %v203, %v219
        %v221 = vsel %vm211, %v218, %v220
        %v222 = vsel %vm210, %v200, %v203
        %v223 = vsel %vm213, %v209, 1326507024
        %v224 = vsel %vm212, %v206, %v223
        %v225 = vsel %vm211, %v222, %v224
        %v226 = vshll.u32 %v186, 8
        %v227 = vmul.u32.u64.compose %v226, %v225
        %v228 = vextract.low.u32 %v227
        %v229 = vextract.high.u32 %v227
        %v230 = vmul.u32.u64.compose %v226, %v221
        %v231 = vextract.low.u32 %v230
        %v232 = vextract.high.u32 %v230
        %v233 = vmul.u32 %v226, %v217
        %v234 = vadd.s32 %v229, %v231
        %vm235 = vc.u32 %v229, %v231
        %v236 = vadd.s32 %v232, 1
        %v237 = vsel %vm235, %v236, %v232
        %v238 = vadd.s32 %v233, %v237
        %v239 = vadd.s32 %v238, 536870912
        %v240 = vshrl.u32 %v239, 30
        %v241 = vshll.u32 %v240, 30
        %v242 = vsub.s32 %v238, %v241
        %vm243 = vcmp.lt.s32.totalorder %v242, 0
        %v244 = vsub.s32 0, %v242
        %v245 = vsel %vm243, %v244, %v242
        %v246 = vclz %v245
        %v247 = vsub.s32 %v246, 2
        %vm248 = vcmp.gt.s32.totalorder 0, %v247
        %v249 = vsel %vm248, 0, %v247
        %v250 = vsub.s32 32, %v249
        %v251 = vshll.u32 %v242, %v249
        %v252 = vshrl.u32 %v234, %v250
        %v253 = vor.u32 %v251, %v252
        %v254 = vsub.s32 4294967266, %v249
        %v255 = vadd.s32 %v254, 127
        %v256 = vshll.u32 %v255, 23
        %v257 = vor.u32 4788187, %v256
        %v258 = vand.u32 2147483647, %v257
        %v260 = vcvt.s32.f32 %v253
        %v261 = vmul.f32 %v260, %v258
        %v262 = vxor.u32 %v261, 2147483648
        %v263 = vsel %vm180, %v262, %v261
        %v264 = vsub.s32 4, %v240
        %v265 = vsel %vm180, %v264, %v240
        %v266 = vsel %vm179, %v176, %v263
        %v267 = vsel %vm179, 0, %v265
        %v268 = vcosq.f32.pop %v266
        %v269 = vsinq.f32.pop %v266
        %vm270 = vweird.f32 %v176
        %v271 = vadd.s32 %v267, 3
        %v272 = vand.u32 %v271, 3
        %vm273 = vcmp.lt.s32.totalorder %v272, 2
        %vm274 = vcmp.eq.s32.totalorder %v272, 0
        %v275 = vxor.u32 %v269, 2147483648
        %v276 = vsel %vm274, %v268, %v275
        %vm277 = vcmp.eq.s32.totalorder %v272, 2
        %v278 = vxor.u32 %v268, 2147483648
        %v279 = vsel %vm277, %v278, %v269
        %v280 = vsel %vm273, %v276, %v279
        %v281 = vsel %vm270, nan, %v280
        %v282 = vand.u32 2147483647, %v177
        %vm283 = vcmp.le.f32.partialorder %v282, 0.7853982
        %vm284 = vcmp.lt.s32.totalorder %v177, 0
        %v285 = vand.u32 %v177, 2139095040
        %v286 = vshrl.u32 %v285, 23
        %v287 = vsub.s32 %v286, 127
        %v288 = vand.u32 2147483647, %v177
        %v289 = vand.u32 %v288, 8388607
        %v290 = vor.u32 %v289, 8388608
        %v291 = vsub.s32 0, %v290
        %v292 = vadd.s32 %v287, 1
        %vm293 = vcmp.gt.s32.totalorder %v292, 0
        %v294 = vsel %vm293, %v292, 0
        %v295 = vshrl.u32 %v294, 5
        %v296 = vand.u32 %v294, 31
        %v297 = vsub.s32 32, %v296
        %v298 = vshrl.u32 683565275, %v297
        %v299 = vshll.u32 683565275, %v296
        %v300 = vshrl.u32 2475754826, %v297
        %v301 = vor.u32 %v299, %v300
        %v302 = vshll.u32 2475754826, %v296
        %v303 = vshrl.u32 2131351028, %v297
        %v304 = vor.u32 %v302, %v303
        %v305 = vshll.u32 2131351028, %v296
        %v306 = vshrl.u32 2102212464, %v297
        %v307 = vor.u32 %v305, %v306
        %v308 = vshll.u32 2102212464, %v296
        %v309 = vshrl.u32 920167782, %v297
        %v310 = vor.u32 %v308, %v309
        %v311 = vshll.u32 920167782, %v296
        %v312 = vshrl.u32 1326507024, %v297
        %v313 = vor.u32 %v311, %v312
        %vm314 = vcmp.lt.s32.totalorder %v295, 1
        %vm315 = vcmp.lt.s32.totalorder %v295, 2
        %vm316 = vcmp.lt.s32.totalorder %v295, 3
        %vm317 = vcmp.lt.s32.totalorder %v295, 4
        %v318 = vsel %vm314, %v298, %v301
        %v319 = vsel %vm317, %v307, 2102212464
        %v320 = vsel %vm316, %v304, %v319
        %v321 = vsel %vm315, %v318, %v320
        %v322 = vsel %vm314, %v301, %v304
        %v323 = vsel %vm317, %v310, 920167782
        %v324 = vsel %vm316, %v307, %v323
        %v325 = vsel %vm315, %v322, %v324
        %v326 = vsel %vm314, %v304, %v307
        %v327 = vsel %vm317, %v313, 1326507024
        %v328 = vsel %vm316, %v310, %v327
        %v329 = vsel %vm315, %v326, %v328
        %v330 = vshll.u32 %v290, 8
        %v331 = vmul.u32.u64.compose %v330, %v329
        %v332 = vextract.low.u32 %v331
        %v333 = vextract.high.u32 %v331
        %v334 = vmul.u32.u64.compose %v330, %v325
        %v335 = vextract.low.u32 %v334
        %v336 = vextract.high.u32 %v334
        %v337 = vmul.u32 %v330, %v321
        %v338 = vadd.s32 %v333, %v335
        %vm339 = vc.u32 %v333, %v335
        %v340 = vadd.s32 %v336, 1
        %v341 = vsel %vm339, %v340, %v336
        %v342 = vadd.s32 %v337, %v341
        %v343 = vadd.s32 %v342, 536870912
        %v344 = vshrl.u32 %v343, 30
        %v345 = vshll.u32 %v344, 30
        %v346 = vsub.s32 %v342, %v345
        %vm347 = vcmp.lt.s32.totalorder %v346, 0
        %v348 = vsub.s32 0, %v346
        %v349 = vsel %vm347, %v348, %v346
        %v350 = vclz %v349
        %v351 = vsub.s32 %v350, 2
        %vm352 = vcmp.gt.s32.totalorder 0, %v351
        %v353 = vsel %vm352, 0, %v351
        %v354 = vsub.s32 32, %v353
        %v355 = vshll.u32 %v346, %v353
        %v356 = vshrl.u32 %v338, %v354
        %v357 = vor.u32 %v355, %v356
        %v358 = vsub.s32 4294967266, %v353
        %v359 = vadd.s32 %v358, 127
        %v360 = vshll.u32 %v359, 23
        %v361 = vor.u32 4788187, %v360
        %v362 = vand.u32 2147483647, %v361
        %v364 = vcvt.s32.f32 %v357
        %v365 = vmul.f32 %v364, %v362
        %v366 = vxor.u32 %v365, 2147483648
        %v367 = vsel %vm284, %v366, %v365
        %v368 = vsub.s32 4, %v344
        %v369 = vsel %vm284, %v368, %v344
        %v370 = vsel %vm283, %v177, %v367
        %v371 = vsel %vm283, 0, %v369
        %v372 = vcosq.f32.pop %v370
        %v373 = vsinq.f32.pop %v370
        %vm374 = vweird.f32 %v177
        %v375 = vadd.s32 %v371, 3
        %v376 = vand.u32 %v375, 3
        %vm377 = vcmp.lt.s32.totalorder %v376, 2
        %vm378 = vcmp.eq.s32.totalorder %v376, 0
        %v379 = vxor.u32 %v373, 2147483648
        %v380 = vsel %vm378, %v372, %v379
        %vm381 = vcmp.eq.s32.totalorder %v376, 2
        %v382 = vxor.u32 %v372, 2147483648
        %v383 = vsel %vm381, %v382, %v373
        %v384 = vsel %vm377, %v380, %v383
        %v385 = vsel %vm374, nan, %v384
        %v387 = vlaneseq
        %v388 = vshrl.u32 %v387, 7
        %v389 = vsub.s32 0, %v388
        %v390 = vrot.slane %v158, %v389
        %v391 = vlaneseq
        %v392 = vshrl.u32 %v391, 7
        %v393 = vsub.s32 1, %v392
        %v394 = vrot.slane %v158, %v393
        %v397 = vmul.f32 %v390, %v281
        %v398 = vmul.f32 %v394, %v385
        %399 = vst [vmem:[%s135] sm:$0x3f] %v397
        %400 = vst [vmem:[%s135 + $0x8] sm:$0x3f] %v398
        %s401 = sand.u32 %s71, 1
        %s402 = scalar_lea.sflag [#allocation3], %s401
        %s403 = sand.u32 %s71, 1
        %s404 = smul.addr %s403, 16
        %s405 = scalar_lea.vmem [#allocation2], %s404
        // Predicated region
        $region29: #{emb_forward.2} parent=27 // pred_check
          %p406 = pneg %p81
        $region30: #{emb_forward.2} parent=27 // pred_check_branch
          %408 = sbr.rel (%p406) target = $region32
        $region31: #{emb_forward.2} parent=27 // pred_region
          %s409 = smul.u32 2, %s16
          %s411 = ssub.s32 256, 256
          %412 = vsyncadd %s402, %s411
          %s413 = smul.addr %s409, 128
          %s414 = scalar_lea.hbm %s2, %s413
          %s416 = sshll.u32 %s405, 4
          %s417 = int_to_ptr.vmem [resolvable:$true] %s416
          %419 = dma.vmem_to_hbm [thread:$0]  %s417, 256, %s414, %s402
        $region32: #{emb_forward.2} parent=27 // pred_fallthru
          _
      $region28: #{emb_forward.2} parent=5 // pred_fallthru
        _
      %p420 = scmp.le.s32.totalorder 2, %s11
      // Predicated region
      $region33: #{emb_forward.2} parent=5 // pred_check
        %p421 = pneg %p420
      $region34: #{emb_forward.2} parent=5 // pred_check_branch
        %423 = sbr.rel (%p421) target = $region36
      $region35: #{emb_forward.2} parent=5 // pred_region
        %s424 = ssub.s32 %s11, 2
        // Predicated region
        $region37: #{emb_forward.2} parent=35 // pred_check
          %p425 = pneg %p87
        $region38: #{emb_forward.2} parent=35 // pred_check_branch
          %427 = sbr.rel (%p425) target = $region40
        $region39: #{emb_forward.2} parent=35 // pred_region
          %s428 = sand.u32 %s72, 1
          %s429 = scalar_lea.sflag [#allocation3], %s428
          %s430 = sand.u32 %s72, 1
          %s431 = smul.addr %s430, 16
          %s432 = scalar_lea.vmem [#allocation2], %s431
          %433 = dma.done %s429, 256
        $region40: #{emb_forward.2} parent=35 // pred_fallthru
          _
      $region36: #{emb_forward.2} parent=5 // pred_fallthru
        _
    $region6: #{emb_forward.2} parent=1 // loop_footer
      %s15 = sadd.s32 1, %s11
    $region7: #{emb_forward.2} parent=1 // loop_footer_branch
      %10 = sbr.rel target = $region3
    $region8: #{emb_forward.2} parent=1 // loop_exit
      _
    %434 = vsyncpa [#allocation3], 1
    %s435 = scalar_lea.sflag [#allocation3], 1
    %436 = vsyncpa %s435, 1

// kernel: emb_forward.3
$region0: #{emb_forward.3}
  #allocation0 [shape = 'u32[]', space=smem, size = 0x4, offset = 0x4, fixed_abs, tag = 'smem constant byte address 0x4 - core index']
  #allocation1 [shape = 'u32[144,128]{1,0:T(1,128)}', space=vmem, size = 0x12000, scoped, tag = 'internal scratch']
  %s0 = inlined_call_operand.vmem [shape: f32[3,6,1], index: 0, kind: input, shape index: {}]
  %s1 = inlined_call_operand.vmem [shape: f32[3,6,1], index: 1, kind: input, shape index: {}]
  %s2 = inlined_call_operand.vmem [shape: f32[1,1024], index: 2, kind: input, shape index: {}]
  %s3 = inlined_call_operand.vmem [shape: f32[1,1024], index: 3, kind: input, shape index: {}]
  %s4 = inlined_call_operand.vmem [shape: f32[1,1024], index: 4, kind: input, shape index: {}]
  %s5 = inlined_call_operand.hbm [shape: f32[18,1024], index: 5, kind: output, shape index: {0}]
  %s6 = inlined_call_operand.hbm [shape: f32[54,1024], index: 6, kind: output, shape index: {1}]
  %7 = xla_tuple %s5, %s6
  %s8 = sld [smem:[#allocation0]]
  $region61: #{emb_forward.3} parent=0
    _
  %s10 = ssub.s32 1, %s8
  %s11 = scalar_select 0, %s10, %s8
  $region1: #{emb_forward.3} parent=0
    #allocation2 [shape = 'u8[49152]{0}', space=vmem, size = 0xc000, scoped, tag = 'output window, operand 0']
    #allocation3 [shape = 's32[2]{0}', space=sflag, size = 0x8, scoped, tag = 'scoped memory for emb_forward.3']
    #allocation4 [shape = 'u8[114688]{0}', space=vmem, size = 0x1c000, scoped, tag = 'output window, operand 1']
    #allocation5 [shape = 's32[2]{0}', space=sflag, size = 0x8, scoped, tag = 'scoped memory for emb_forward.3']
    %12 = vsyncpa [#allocation3], 0
    %s13 = scalar_lea.sflag [#allocation3], 1
    %14 = vsyncpa %s13, 0
    %15 = vsyncpa [#allocation5], 0
    %s16 = scalar_lea.sflag [#allocation5], 1
    %17 = vsyncpa %s16, 0
    loop: start=0, step=1, limit=6
    $region2: #{emb_forward.3} parent=1 // loop_pre_header
      _
    $region3: #{emb_forward.3} parent=1 // loop_header
      %s19 = sphi 0, %s23
      %p20 = scmp.ge.s32.totalorder %s19, 6
      %s27 = sphi 0, %s27
      %s29 = sphi 0, %s27
      %s30 = sphi 0, %s29
      %s44 = sphi 0, %s30
      %s48 = sphi 0, %s48
      %s50 = sphi 0, %s48
      %s51 = sphi 0, %s50
      %s65 = sphi 0, %s51
      %s71 = sphi 0, %s73
      %s74 = sphi 0, %s71
      %s75 = sphi 0, %s74
      %s91 = sphi 0, %s75
      %s97 = sphi 0, %s99
      %s100 = sphi 0, %s97
      %s101 = sphi 0, %s100
      %s117 = sphi 0, %s101
      %s123 = sphi 0, %s125
      %s126 = sphi 0, %s123
      %s127 = sphi 0, %s126
      %s143 = sphi 0, %s127
      %s149 = sphi 0, %s151
      %s152 = sphi 0, %s149
      %s153 = sphi 0, %s152
      %s169 = sphi 0, %s153
      %s175 = sphi 0, %s177
      %s178 = sphi 0, %s175
      %s179 = sphi 0, %s178
      %s195 = sphi 0, %s179
    $region4: #{emb_forward.3} parent=1 // loop_header_branch
      %22 = sbr.rel (%p20) target = $region8
    $region5: #{emb_forward.3} parent=1 // loop_body
      %s24 = ssub.s32 %s19, 1
      %s25 = ssub.s32 %s19, 2
      %s26 = sadd.s32 %s19, 1
      %s28 = sadd.s32 %s27, 1
      %p31 = scmp.eq.s32.totalorder %s19, 3
      %p32 = scmp.ne.s32.totalorder %s27, %s29
      %p33 = scmp.eq.s32.totalorder %s19, 0
      %p34 = por %p32, %p33
      %p35 = scmp.ne.s32.totalorder %s27, %s29
      %p36 = scmp.eq.s32.totalorder %s24, 3
      %p37 = por %p35, %p36
      %p38 = scmp.ne.s32.totalorder %s29, %s30
      %p39 = scmp.eq.s32.totalorder %s24, 0
      %p40 = por %p38, %p39
      %p41 = scmp.ne.s32.totalorder %s29, %s30
      %p42 = scmp.eq.s32.totalorder %s25, 3
      %p43 = por %p41, %p42
      %p45 = scmp.ne.s32.totalorder %s30, %s44
      %p46 = scmp.eq.s32.totalorder %s25, 0
      %p47 = por %p45, %p46
      %s49 = sadd.s32 %s48, 1
      %p52 = scmp.eq.s32.totalorder %s19, 3
      %p53 = scmp.ne.s32.totalorder %s48, %s50
      %p54 = scmp.eq.s32.totalorder %s19, 0
      %p55 = por %p53, %p54
      %p56 = scmp.ne.s32.totalorder %s48, %s50
      %p57 = scmp.eq.s32.totalorder %s24, 3
      %p58 = por %p56, %p57
      %p59 = scmp.ne.s32.totalorder %s50, %s51
      %p60 = scmp.eq.s32.totalorder %s24, 0
      %p61 = por %p59, %p60
      %p62 = scmp.ne.s32.totalorder %s50, %s51
      %p63 = scmp.eq.s32.totalorder %s25, 3
      %p64 = por %p62, %p63
      %p66 = scmp.ne.s32.totalorder %s51, %s65
      %p67 = scmp.eq.s32.totalorder %s25, 0
      %p68 = por %p66, %p67
      %s69 = ssub.s32 %s19, %s26
      %p70 = scmp.eq.s32.totalorder %s69, 0
      %s72 = sadd.s32 %s71, 1
      %s73 = scalar_select %p70, %s71, %s72
      %p76 = pneg %p70
      %p77 = scmp.eq.s32.totalorder %s19, 3
      %p78 = por %p76, %p77
      %p79 = scmp.ne.s32.totalorder %s71, %s74
      %p80 = scmp.eq.s32.totalorder %s19, 0
      %p81 = por %p79, %p80
      %p82 = scmp.ne.s32.totalorder %s71, %s74
      %p83 = scmp.eq.s32.totalorder %s24, 3
      %p84 = por %p82, %p83
      %p85 = scmp.ne.s32.totalorder %s74, %s75
      %p86 = scmp.eq.s32.totalorder %s24, 0
      %p87 = por %p85, %p86
      %p88 = scmp.ne.s32.totalorder %s74, %s75
      %p89 = scmp.eq.s32.totalorder %s25, 3
      %p90 = por %p88, %p89
      %p92 = scmp.ne.s32.totalorder %s75, %s91
      %p93 = scmp.eq.s32.totalorder %s25, 0
      %p94 = por %p92, %p93
      %s95 = ssub.s32 %s19, %s26
      %p96 = scmp.eq.s32.totalorder %s95, 0
      %s98 = sadd.s32 %s97, 1
      %s99 = scalar_select %p96, %s97, %s98
      %p102 = pneg %p96
      %p103 = scmp.eq.s32.totalorder %s19, 3
      %p104 = por %p102, %p103
      %p105 = scmp.ne.s32.totalorder %s97, %s100
      %p106 = scmp.eq.s32.totalorder %s19, 0
      %p107 = por %p105, %p106
      %p108 = scmp.ne.s32.totalorder %s97, %s100
      %p109 = scmp.eq.s32.totalorder %s24, 3
      %p110 = por %p108, %p109
      %p111 = scmp.ne.s32.totalorder %s100, %s101
      %p112 = scmp.eq.s32.totalorder %s24, 0
      %p113 = por %p111, %p112
      %p114 = scmp.ne.s32.totalorder %s100, %s101
      %p115 = scmp.eq.s32.totalorder %s25, 3
      %p116 = por %p114, %p115
      %p118 = scmp.ne.s32.totalorder %s101, %s117
      %p119 = scmp.eq.s32.totalorder %s25, 0
      %p120 = por %p118, %p119
      %s121 = ssub.s32 %s19, %s26
      %p122 = scmp.eq.s32.totalorder %s121, 0
      %s124 = sadd.s32 %s123, 1
      %s125 = scalar_select %p122, %s123, %s124
      %p128 = pneg %p122
      %p129 = scmp.eq.s32.totalorder %s19, 3
      %p130 = por %p128, %p129
      %p131 = scmp.ne.s32.totalorder %s123, %s126
      %p132 = scmp.eq.s32.totalorder %s19, 0
      %p133 = por %p131, %p132
      %p134 = scmp.ne.s32.totalorder %s123, %s126
      %p135 = scmp.eq.s32.totalorder %s24, 3
      %p136 = por %p134, %p135
      %p137 = scmp.ne.s32.totalorder %s126, %s127
      %p138 = scmp.eq.s32.totalorder %s24, 0
      %p139 = por %p137, %p138
      %p140 = scmp.ne.s32.totalorder %s126, %s127
      %p141 = scmp.eq.s32.totalorder %s25, 3
      %p142 = por %p140, %p141
      %p144 = scmp.ne.s32.totalorder %s127, %s143
      %p145 = scmp.eq.s32.totalorder %s25, 0
      %p146 = por %p144, %p145
      %s147 = ssub.s32 %s19, %s26
      %p148 = scmp.eq.s32.totalorder %s147, 0
      %s150 = sadd.s32 %s149, 1
      %s151 = scalar_select %p148, %s149, %s150
      %p154 = pneg %p148
      %p155 = scmp.eq.s32.totalorder %s19, 3
      %p156 = por %p154, %p155
      %p157 = scmp.ne.s32.totalorder %s149, %s152
      %p158 = scmp.eq.s32.totalorder %s19, 0
      %p159 = por %p157, %p158
      %p160 = scmp.ne.s32.totalorder %s149, %s152
      %p161 = scmp.eq.s32.totalorder %s24, 3
      %p162 = por %p160, %p161
      %p163 = scmp.ne.s32.totalorder %s152, %s153
      %p164 = scmp.eq.s32.totalorder %s24, 0
      %p165 = por %p163, %p164
      %p166 = scmp.ne.s32.totalorder %s152, %s153
      %p167 = scmp.eq.s32.totalorder %s25, 3
      %p168 = por %p166, %p167
      %p170 = scmp.ne.s32.totalorder %s153, %s169
      %p171 = scmp.eq.s32.totalorder %s25, 0
      %p172 = por %p170, %p171
      %s173 = ssub.s32 %s19, %s26
      %p174 = scmp.eq.s32.totalorder %s173, 0
      %s176 = sadd.s32 %s175, 1
      %s177 = scalar_select %p174, %s175, %s176
      %p180 = pneg %p174
      %p181 = scmp.eq.s32.totalorder %s19, 3
      %p182 = por %p180, %p181
      %p183 = scmp.ne.s32.totalorder %s175, %s178
      %p184 = scmp.eq.s32.totalorder %s19, 0
      %p185 = por %p183, %p184
      %p186 = scmp.ne.s32.totalorder %s175, %s178
      %p187 = scmp.eq.s32.totalorder %s24, 3
      %p188 = por %p186, %p187
      %p189 = scmp.ne.s32.totalorder %s178, %s179
      %p190 = scmp.eq.s32.totalorder %s24, 0
      %p191 = por %p189, %p190
      %p192 = scmp.ne.s32.totalorder %s178, %s179
      %p193 = scmp.eq.s32.totalorder %s25, 3
      %p194 = por %p192, %p193
      %p196 = scmp.ne.s32.totalorder %s179, %s195
      %p197 = scmp.eq.s32.totalorder %s25, 0
      %p198 = por %p196, %p197
      %p199 = scmp.le.s32.totalorder 1, %s19
      %p200 = scmp.lt.s32.totalorder %s19, 5
      %p201 = pnand %p199, %p200
      %p202 = pneg %p201
      // Predicated region
      $region9: #{emb_forward.3} parent=5 // pred_check
        _
      $region10: #{emb_forward.3} parent=5 // pred_check_branch
        %204 = sbr.rel (%p201) target = $region12
      $region11: #{emb_forward.3} parent=5 // pred_region
        %s205 = ssub.s32 %s19, 1
        // Predicated region
        $region13: #{emb_forward.3} parent=11 // pred_check
          %p206 = pneg %p40
        $region14: #{emb_forward.3} parent=11 // pred_check_branch
          %208 = sbr.rel (%p206) target = $region16
        $region15: #{emb_forward.3} parent=11 // pred_region
          _
        $region16: #{emb_forward.3} parent=11 // pred_fallthru
          _
        // Predicated region
        $region17: #{emb_forward.3} parent=11 // pred_check
          %p209 = pneg %p61
        $region18: #{emb_forward.3} parent=11 // pred_check_branch
          %211 = sbr.rel (%p209) target = $region20
        $region19: #{emb_forward.3} parent=11 // pred_region
          _
        $region20: #{emb_forward.3} parent=11 // pred_fallthru
          _
      $region12: #{emb_forward.3} parent=5 // pred_fallthru
        _
      %p212 = scmp.lt.s32.totalorder %s19, 4
      // Predicated region
      $region21: #{emb_forward.3} parent=5 // pred_check
        %p213 = pneg %p212
      $region22: #{emb_forward.3} parent=5 // pred_check_branch
        %215 = sbr.rel (%p213) target = $region24
      $region23: #{emb_forward.3} parent=5 // pred_region
        // Predicated region
        $region25: #{emb_forward.3} parent=23 // pred_check
          %p216 = pneg %p81
        $region26: #{emb_forward.3} parent=23 // pred_check_branch
          %218 = sbr.rel (%p216) target = $region28
        $region27: #{emb_forward.3} parent=23 // pred_region
          %s219 = smul.u32 2, %s19
          %p220 = scmp.lt.s32.totalorder %s219, 7
          %s221 = scalar_select %p220, %s219, 7
          %s222 = scalar_lea.vmem %s2, %s221
          %s223 = smul.u32 2, %s19
        $region28: #{emb_forward.3} parent=23 // pred_fallthru
          _
        // Predicated region
        $region29: #{emb_forward.3} parent=23 // pred_check
          %p224 = pneg %p107
        $region30: #{emb_forward.3} parent=23 // pred_check_branch
          %226 = sbr.rel (%p224) target = $region32
        $region31: #{emb_forward.3} parent=23 // pred_region
          %s227 = smul.u32 2, %s19
          %p228 = scmp.lt.s32.totalorder %s227, 7
          %s229 = scalar_select %p228, %s227, 7
          %s230 = scalar_lea.vmem %s3, %s229
          %s231 = smul.u32 2, %s19
        $region32: #{emb_forward.3} parent=23 // pred_fallthru
          _
        // Predicated region
        $region33: #{emb_forward.3} parent=23 // pred_check
          %p232 = pneg %p133
        $region34: #{emb_forward.3} parent=23 // pred_check_branch
          %234 = sbr.rel (%p232) target = $region36
        $region35: #{emb_forward.3} parent=23 // pred_region
          %s235 = smul.u32 2, %s19
          %p236 = scmp.lt.s32.totalorder %s235, 7
          %s237 = scalar_select %p236, %s235, 7
          %s238 = scalar_lea.vmem %s4, %s237
          %s239 = smul.u32 2, %s19
        $region36: #{emb_forward.3} parent=23 // pred_fallthru
          _
      $region24: #{emb_forward.3} parent=5 // pred_fallthru
        _
      %p240 = scmp.le.s32.totalorder 1, %s19
      %p241 = scmp.lt.s32.totalorder %s19, 5
      %p242 = pnand %p240, %p241
      %p243 = pneg %p242
      // Predicated region
      $region37: #{emb_forward.3} parent=5 // pred_check
        _
      $region38: #{emb_forward.3} parent=5 // pred_check_branch
        %245 = sbr.rel (%p242) target = $region40
      $region39: #{emb_forward.3} parent=5 // pred_region
        %s246 = ssub.s32 %s19, 1
        %p247 = pneg %p40
        %p248 = pneg %p37
        %p249 = pneg %p61
        %p250 = pneg %p58
        %s251 = smul.u32 2, %s24
        %p252 = scmp.lt.s32.totalorder %s251, 7
        %s253 = scalar_select %p252, %s251, 7
        %s254 = scalar_lea.vmem %s2, %s253
        %p255 = pneg %p87
        %p256 = pneg %p84
        %s257 = smul.u32 2, %s24
        %p258 = scmp.lt.s32.totalorder %s257, 7
        %s259 = scalar_select %p258, %s257, 7
        %s260 = scalar_lea.vmem %s3, %s259
        %p261 = pneg %p113
        %p262 = pneg %p110
        %s263 = smul.u32 2, %s24
        %p264 = scmp.lt.s32.totalorder %s263, 7
        %s265 = scalar_select %p264, %s263, 7
        %s266 = scalar_lea.vmem %s4, %s265
        %p267 = pneg %p139
        %p268 = pneg %p136
        %p269 = pneg %p165
        %p270 = pneg %p162
        %s271 = sand.u32 %s152, 1
        %s272 = scalar_lea.sflag [#allocation3], %s271
        %s273 = sand.u32 %s152, 1
        %s274 = smul.addr %s273, 48
        %s275 = scalar_lea.vmem [#allocation2], %s274
        %p276 = pneg %p191
        %p277 = pneg %p188
        %s278 = sand.u32 %s178, 1
        %s279 = scalar_lea.sflag [#allocation5], %s278
        %s280 = sand.u32 %s178, 1
        %s281 = smul.addr %s280, 112
        %s282 = scalar_lea.vmem [#allocation4], %s281
        %s283 = smul.u32 2, %s24
        %p284 = scmp.lt.s32.totalorder %s283, 7
        %s285 = scalar_select %p284, %s283, 7
        %s286 = scalar_lea.vmem %s2, %s285
        %s287 = smul.u32 2, %s24
        %s288 = smul.u32 2, %s24
        %p289 = scmp.lt.s32.totalorder %s288, 7
        %s290 = scalar_select %p289, %s288, 7
        %s291 = scalar_lea.vmem %s3, %s290
        %s292 = smul.u32 2, %s24
        %s293 = smul.u32 2, %s24
        %p294 = scmp.lt.s32.totalorder %s293, 7
        %s295 = scalar_select %p294, %s293, 7
        %s296 = scalar_lea.vmem %s4, %s295
        %s297 = smul.u32 2, %s24
        %s298 = smul.u32 2, %s24
        %s299 = smul.u32 2, %s24
        %v300 = vld [vmem:[%s0] sm:$0x3f]
        %v301 = vld [vmem:[%s0 + $0x8] sm:$0x3f]
        %v302 = vld [vmem:[%s0 + $0x10] sm:$0x3f]
        %v303 = vld [vmem:[%s1] sm:$0x3f]
        %v304 = vld [vmem:[%s1 + $0x8] sm:$0x3f]
        %v305 = vld [vmem:[%s1 + $0x10] sm:$0x3f]
        %v306 = vld [vmem:[%s286] sm:$0x3]
        %v307 = vmul.f32 %v306, 0.2
        %v308 = vld [vmem:[%s291] sm:$0x3]
        %v309 = vld [vmem:[%s296] sm:$0x3]
        %v310 = vand.u32 2147483647, %v308
        %vm311 = vcmp.le.f32.partialorder %v310, 0.7853982
        %vm312 = vcmp.lt.s32.totalorder %v308, 0
        %v313 = vand.u32 %v308, 2139095040
        %v314 = vshrl.u32 %v313, 23
        %v315 = vsub.s32 %v314, 127
        %v316 = vand.u32 2147483647, %v308
        %v317 = vand.u32 %v316, 8388607
        %v318 = vor.u32 %v317, 8388608
        %v319 = vsub.s32 0, %v318
        %v320 = vadd.s32 %v315, 1
        %vm321 = vcmp.gt.s32.totalorder %v320, 0
        %v322 = vsel %vm321, %v320, 0
        %v323 = vshrl.u32 %v322, 5
        %v324 = vand.u32 %v322, 31
        %v325 = vsub.s32 32, %v324
        %v326 = vshrl.u32 683565275, %v325
        %v327 = vshll.u32 683565275, %v324
        %v328 = vshrl.u32 2475754826, %v325
        %v329 = vor.u32 %v327, %v328
        %v330 = vshll.u32 2475754826, %v324
        %v331 = vshrl.u32 2131351028, %v325
        %v332 = vor.u32 %v330, %v331
        %v333 = vshll.u32 2131351028, %v324
        %v334 = vshrl.u32 2102212464, %v325
        %v335 = vor.u32 %v333, %v334
        %v336 = vshll.u32 2102212464, %v324
        %v337 = vshrl.u32 920167782, %v325
        %v338 = vor.u32 %v336, %v337
        %v339 = vshll.u32 920167782, %v324
        %v340 = vshrl.u32 1326507024, %v325
        %v341 = vor.u32 %v339, %v340
        %vm342 = vcmp.lt.s32.totalorder %v323, 1
        %vm343 = vcmp.lt.s32.totalorder %v323, 2
        %vm344 = vcmp.lt.s32.totalorder %v323, 3
        %vm345 = vcmp.lt.s32.totalorder %v323, 4
        %v346 = vsel %vm342, %v326, %v329
        %v347 = vsel %vm345, %v335, 2102212464
        %v348 = vsel %vm344, %v332, %v347
        %v349 = vsel %vm343, %v346, %v348
        %v350 = vsel %vm342, %v329, %v332
        %v351 = vsel %vm345, %v338, 920167782
        %v352 = vsel %vm344, %v335, %v351
        %v353 = vsel %vm343, %v350, %v352
        %v354 = vsel %vm342, %v332, %v335
        %v355 = vsel %vm345, %v341, 1326507024
        %v356 = vsel %vm344, %v338, %v355
        %v357 = vsel %vm343, %v354, %v356
        %v358 = vshll.u32 %v318, 8
        %v359 = vmul.u32.u64.compose %v358, %v357
        %v360 = vextract.low.u32 %v359
        %v361 = vextract.high.u32 %v359
        %v362 = vmul.u32.u64.compose %v358, %v353
        %v363 = vextract.low.u32 %v362
        %v364 = vextract.high.u32 %v362
        %v365 = vmul.u32 %v358, %v349
        %v366 = vadd.s32 %v361, %v363
        %vm367 = vc.u32 %v361, %v363
        %v368 = vadd.s32 %v364, 1
        %v369 = vsel %vm367, %v368, %v364
        %v370 = vadd.s32 %v365, %v369
        %v371 = vadd.s32 %v370, 536870912
        %v372 = vshrl.u32 %v371, 30
        %v373 = vshll.u32 %v372, 30
        %v374 = vsub.s32 %v370, %v373
        %vm375 = vcmp.lt.s32.totalorder %v374, 0
        %v376 = vsub.s32 0, %v374
        %v377 = vsel %vm375, %v376, %v374
        %v378 = vclz %v377
        %v379 = vsub.s32 %v378, 2
        %vm380 = vcmp.gt.s32.totalorder 0, %v379
        %v381 = vsel %vm380, 0, %v379
        %v382 = vsub.s32 32, %v381
        %v383 = vshll.u32 %v374, %v381
        %v384 = vshrl.u32 %v366, %v382
        %v385 = vor.u32 %v383, %v384
        %v386 = vsub.s32 4294967266, %v381
        %v387 = vadd.s32 %v386, 127
        %v388 = vshll.u32 %v387, 23
        %v389 = vor.u32 4788187, %v388
        %v390 = vand.u32 2147483647, %v389
        %v392 = vcvt.s32.f32 %v385
        %v393 = vmul.f32 %v392, %v390
        %v394 = vxor.u32 %v393, 2147483648
        %v395 = vsel %vm312, %v394, %v393
        %v396 = vsub.s32 4, %v372
        %v397 = vsel %vm312, %v396, %v372
        %v398 = vsel %vm311, %v308, %v395
        %v399 = vsel %vm311, 0, %v397
        %v400 = vcosq.f32.pop %v398
        %v401 = vsinq.f32.pop %v398
        %vm402 = vweird.f32 %v308
        %v403 = vand.u32 %v399, 3
        %vm404 = vcmp.lt.s32.totalorder %v403, 2
        %vm405 = vcmp.eq.s32.totalorder %v403, 0
        %v406 = vxor.u32 %v401, 2147483648
        %v407 = vsel %vm405, %v400, %v406
        %vm408 = vcmp.eq.s32.totalorder %v403, 2
        %v409 = vxor.u32 %v400, 2147483648
        %v410 = vsel %vm408, %v409, %v401
        %v411 = vsel %vm404, %v407, %v410
        %v412 = vsel %vm402, nan, %v411
        %v413 = vand.u32 2147483647, %v308
        %vm414 = vcmp.le.f32.partialorder %v413, 0.7853982
        %vm415 = vcmp.lt.s32.totalorder %v308, 0
        %v416 = vand.u32 %v308, 2139095040
        %v417 = vshrl.u32 %v416, 23
        %v418 = vsub.s32 %v417, 127
        %v419 = vand.u32 2147483647, %v308
        %v420 = vand.u32 %v419, 8388607
        %v421 = vor.u32 %v420, 8388608
        %v422 = vsub.s32 0, %v421
        %v423 = vadd.s32 %v418, 1
        %vm424 = vcmp.gt.s32.totalorder %v423, 0
        %v425 = vsel %vm424, %v423, 0
        %v426 = vshrl.u32 %v425, 5
        %v427 = vand.u32 %v425, 31
        %v428 = vsub.s32 32, %v427
        %v429 = vshrl.u32 683565275, %v428
        %v430 = vshll.u32 683565275, %v427
        %v431 = vshrl.u32 2475754826, %v428
        %v432 = vor.u32 %v430, %v431
        %v433 = vshll.u32 2475754826, %v427
        %v434 = vshrl.u32 2131351028, %v428
        %v435 = vor.u32 %v433, %v434
        %v436 = vshll.u32 2131351028, %v427
        %v437 = vshrl.u32 2102212464, %v428
        %v438 = vor.u32 %v436, %v437
        %v439 = vshll.u32 2102212464, %v427
        %v440 = vshrl.u32 920167782, %v428
        %v441 = vor.u32 %v439, %v440
        %v442 = vshll.u32 920167782, %v427
        %v443 = vshrl.u32 1326507024, %v428
        %v444 = vor.u32 %v442, %v443
        %vm445 = vcmp.lt.s32.totalorder %v426, 1
        %vm446 = vcmp.lt.s32.totalorder %v426, 2
        %vm447 = vcmp.lt.s32.totalorder %v426, 3
        %vm448 = vcmp.lt.s32.totalorder %v426, 4
        %v449 = vsel %vm445, %v429, %v432
        %v450 = vsel %vm448, %v438, 2102212464
        %v451 = vsel %vm447, %v435, %v450
        %v452 = vsel %vm446, %v449, %v451
        %v453 = vsel %vm445, %v432, %v435
        %v454 = vsel %vm448, %v441, 920167782
        %v455 = vsel %vm447, %v438, %v454
        %v456 = vsel %vm446, %v453, %v455
        %v457 = vsel %vm445, %v435, %v438
        %v458 = vsel %vm448, %v444, 1326507024
        %v459 = vsel %vm447, %v441, %v458
        %v460 = vsel %vm446, %v457, %v459
        %v461 = vshll.u32 %v421, 8
        %v462 = vmul.u32.u64.compose %v461, %v460
        %v463 = vextract.low.u32 %v462
        %v464 = vextract.high.u32 %v462
        %v465 = vmul.u32.u64.compose %v461, %v456
        %v466 = vextract.low.u32 %v465
        %v467 = vextract.high.u32 %v465
        %v468 = vmul.u32 %v461, %v452
        %v469 = vadd.s32 %v464, %v466
        %vm470 = vc.u32 %v464, %v466
        %v471 = vadd.s32 %v467, 1
        %v472 = vsel %vm470, %v471, %v467
        %v473 = vadd.s32 %v468, %v472
        %v474 = vadd.s32 %v473, 536870912
        %v475 = vshrl.u32 %v474, 30
        %v476 = vshll.u32 %v475, 30
        %v477 = vsub.s32 %v473, %v476
        %vm478 = vcmp.lt.s32.totalorder %v477, 0
        %v479 = vsub.s32 0, %v477
        %v480 = vsel %vm478, %v479, %v477
        %v481 = vclz %v480
        %v482 = vsub.s32 %v481, 2
        %vm483 = vcmp.gt.s32.totalorder 0, %v482
        %v484 = vsel %vm483, 0, %v482
        %v485 = vsub.s32 32, %v484
        %v486 = vshll.u32 %v477, %v484
        %v487 = vshrl.u32 %v469, %v485
        %v488 = vor.u32 %v486, %v487
        %v489 = vsub.s32 4294967266, %v484
        %v490 = vadd.s32 %v489, 127
        %v491 = vshll.u32 %v490, 23
        %v492 = vor.u32 4788187, %v491
        %v493 = vand.u32 2147483647, %v492
        %v495 = vcvt.s32.f32 %v488
        %v496 = vmul.f32 %v495, %v493
        %v497 = vxor.u32 %v496, 2147483648
        %v498 = vsel %vm415, %v497, %v496
        %v499 = vsub.s32 4, %v475
        %v500 = vsel %vm415, %v499, %v475
        %v501 = vsel %vm414, %v308, %v498
        %v502 = vsel %vm414, 0, %v500
        %v503 = vcosq.f32.pop %v501
        %v504 = vsinq.f32.pop %v501
        %vm505 = vweird.f32 %v308
        %v506 = vadd.s32 %v502, 3
        %v507 = vand.u32 %v506, 3
        %vm508 = vcmp.lt.s32.totalorder %v507, 2
        %vm509 = vcmp.eq.s32.totalorder %v507, 0
        %v510 = vxor.u32 %v504, 2147483648
        %v511 = vsel %vm509, %v503, %v510
        %vm512 = vcmp.eq.s32.totalorder %v507, 2
        %v513 = vxor.u32 %v503, 2147483648
        %v514 = vsel %vm512, %v513, %v504
        %v515 = vsel %vm508, %v511, %v514
        %v516 = vsel %vm505, nan, %v515
        %v517 = vand.u32 2147483647, %v309
        %vm518 = vcmp.le.f32.partialorder %v517, 0.7853982
        %vm519 = vcmp.lt.s32.totalorder %v309, 0
        %v520 = vand.u32 %v309, 2139095040
        %v521 = vshrl.u32 %v520, 23
        %v522 = vsub.s32 %v521, 127
        %v523 = vand.u32 2147483647, %v309
        %v524 = vand.u32 %v523, 8388607
        %v525 = vor.u32 %v524, 8388608
        %v526 = vsub.s32 0, %v525
        %v527 = vadd.s32 %v522, 1
        %vm528 = vcmp.gt.s32.totalorder %v527, 0
        %v529 = vsel %vm528, %v527, 0
        %v530 = vshrl.u32 %v529, 5
        %v531 = vand.u32 %v529, 31
        %v532 = vsub.s32 32, %v531
        %v533 = vshrl.u32 683565275, %v532
        %v534 = vshll.u32 683565275, %v531
        %v535 = vshrl.u32 2475754826, %v532
        %v536 = vor.u32 %v534, %v535
        %v537 = vshll.u32 2475754826, %v531
        %v538 = vshrl.u32 2131351028, %v532
        %v539 = vor.u32 %v537, %v538
        %v540 = vshll.u32 2131351028, %v531
        %v541 = vshrl.u32 2102212464, %v532
        %v542 = vor.u32 %v540, %v541
        %v543 = vshll.u32 2102212464, %v531
        %v544 = vshrl.u32 920167782, %v532
        %v545 = vor.u32 %v543, %v544
        %v546 = vshll.u32 920167782, %v531
        %v547 = vshrl.u32 1326507024, %v532
        %v548 = vor.u32 %v546, %v547
        %vm549 = vcmp.lt.s32.totalorder %v530, 1
        %vm550 = vcmp.lt.s32.totalorder %v530, 2
        %vm551 = vcmp.lt.s32.totalorder %v530, 3
        %vm552 = vcmp.lt.s32.totalorder %v530, 4
        %v553 = vsel %vm549, %v533, %v536
        %v554 = vsel %vm552, %v542, 2102212464
        %v555 = vsel %vm551, %v539, %v554
        %v556 = vsel %vm550, %v553, %v555
        %v557 = vsel %vm549, %v536, %v539
        %v558 = vsel %vm552, %v545, 920167782
        %v559 = vsel %vm551, %v542, %v558
        %v560 = vsel %vm550, %v557, %v559
        %v561 = vsel %vm549, %v539, %v542
        %v562 = vsel %vm552, %v548, 1326507024
        %v563 = vsel %vm551, %v545, %v562
        %v564 = vsel %vm550, %v561, %v563
        %v565 = vshll.u32 %v525, 8
        %v566 = vmul.u32.u64.compose %v565, %v564
        %v567 = vextract.low.u32 %v566
        %v568 = vextract.high.u32 %v566
        %v569 = vmul.u32.u64.compose %v565, %v560
        %v570 = vextract.low.u32 %v569
        %v571 = vextract.high.u32 %v569
        %v572 = vmul.u32 %v565, %v556
        %v573 = vadd.s32 %v568, %v570
        %vm574 = vc.u32 %v568, %v570
        %v575 = vadd.s32 %v571, 1
        %v576 = vsel %vm574, %v575, %v571
        %v577 = vadd.s32 %v572, %v576
        %v578 = vadd.s32 %v577, 536870912
        %v579 = vshrl.u32 %v578, 30
        %v580 = vshll.u32 %v579, 30
        %v581 = vsub.s32 %v577, %v580
        %vm582 = vcmp.lt.s32.totalorder %v581, 0
        %v583 = vsub.s32 0, %v581
        %v584 = vsel %vm582, %v583, %v581
        %v585 = vclz %v584
        %v586 = vsub.s32 %v585, 2
        %vm587 = vcmp.gt.s32.totalorder 0, %v586
        %v588 = vsel %vm587, 0, %v586
        %v589 = vsub.s32 32, %v588
        %v590 = vshll.u32 %v581, %v588
        %v591 = vshrl.u32 %v573, %v589
        %v592 = vor.u32 %v590, %v591
        %v593 = vsub.s32 4294967266, %v588
        %v594 = vadd.s32 %v593, 127
        %v595 = vshll.u32 %v594, 23
        %v596 = vor.u32 4788187, %v595
        %v597 = vand.u32 2147483647, %v596
        %v599 = vcvt.s32.f32 %v592
        %v600 = vmul.f32 %v599, %v597
        %v601 = vxor.u32 %v600, 2147483648
        %v602 = vsel %vm519, %v601, %v600
        %v603 = vsub.s32 4, %v579
        %v604 = vsel %vm519, %v603, %v579
        %v605 = vsel %vm518, %v309, %v602
        %v606 = vsel %vm518, 0, %v604
        %v607 = vcosq.f32.pop %v605
        %v608 = vsinq.f32.pop %v605
        %vm609 = vweird.f32 %v309
        %v610 = vand.u32 %v606, 3
        %vm611 = vcmp.lt.s32.totalorder %v610, 2
        %vm612 = vcmp.eq.s32.totalorder %v610, 0
        %v613 = vxor.u32 %v608, 2147483648
        %v614 = vsel %vm612, %v607, %v613
        %vm615 = vcmp.eq.s32.totalorder %v610, 2
        %v616 = vxor.u32 %v607, 2147483648
        %v617 = vsel %vm615, %v616, %v608
        %v618 = vsel %vm611, %v614, %v617
        %v619 = vsel %vm609, nan, %v618
        %v620 = vand.u32 2147483647, %v309
        %vm621 = vcmp.le.f32.partialorder %v620, 0.7853982
        %vm622 = vcmp.lt.s32.totalorder %v309, 0
        %v623 = vand.u32 %v309, 2139095040
        %v624 = vshrl.u32 %v623, 23
        %v625 = vsub.s32 %v624, 127
        %v626 = vand.u32 2147483647, %v309
        %v627 = vand.u32 %v626, 8388607
        %v628 = vor.u32 %v627, 8388608
        %v629 = vsub.s32 0, %v628
        %v630 = vadd.s32 %v625, 1
        %vm631 = vcmp.gt.s32.totalorder %v630, 0
        %v632 = vsel %vm631, %v630, 0
        %v633 = vshrl.u32 %v632, 5
        %v634 = vand.u32 %v632, 31
        %v635 = vsub.s32 32, %v634
        %v636 = vshrl.u32 683565275, %v635
        %v637 = vshll.u32 683565275, %v634
        %v638 = vshrl.u32 2475754826, %v635
        %v639 = vor.u32 %v637, %v638
        %v640 = vshll.u32 2475754826, %v634
        %v641 = vshrl.u32 2131351028, %v635
        %v642 = vor.u32 %v640, %v641
        %v643 = vshll.u32 2131351028, %v634
        %v644 = vshrl.u32 2102212464, %v635
        %v645 = vor.u32 %v643, %v644
        %v646 = vshll.u32 2102212464, %v634
        %v647 = vshrl.u32 920167782, %v635
        %v648 = vor.u32 %v646, %v647
        %v649 = vshll.u32 920167782, %v634
        %v650 = vshrl.u32 1326507024, %v635
        %v651 = vor.u32 %v649, %v650
        %vm652 = vcmp.lt.s32.totalorder %v633, 1
        %vm653 = vcmp.lt.s32.totalorder %v633, 2
        %vm654 = vcmp.lt.s32.totalorder %v633, 3
        %vm655 = vcmp.lt.s32.totalorder %v633, 4
        %v656 = vsel %vm652, %v636, %v639
        %v657 = vsel %vm655, %v645, 2102212464
        %v658 = vsel %vm654, %v642, %v657
        %v659 = vsel %vm653, %v656, %v658
        %v660 = vsel %vm652, %v639, %v642
        %v661 = vsel %vm655, %v648, 920167782
        %v662 = vsel %vm654, %v645, %v661
        %v663 = vsel %vm653, %v660, %v662
        %v664 = vsel %vm652, %v642, %v645
        %v665 = vsel %vm655, %v651, 1326507024
        %v666 = vsel %vm654, %v648, %v665
        %v667 = vsel %vm653, %v664, %v666
        %v668 = vshll.u32 %v628, 8
        %v669 = vmul.u32.u64.compose %v668, %v667
        %v670 = vextract.low.u32 %v669
        %v671 = vextract.high.u32 %v669
        %v672 = vmul.u32.u64.compose %v668, %v663
        %v673 = vextract.low.u32 %v672
        %v674 = vextract.high.u32 %v672
        %v675 = vmul.u32 %v668, %v659
        %v676 = vadd.s32 %v671, %v673
        %vm677 = vc.u32 %v671, %v673
        %v678 = vadd.s32 %v674, 1
        %v679 = vsel %vm677, %v678, %v674
        %v680 = vadd.s32 %v675, %v679
        %v681 = vadd.s32 %v680, 536870912
        %v682 = vshrl.u32 %v681, 30
        %v683 = vshll.u32 %v682, 30
        %v684 = vsub.s32 %v680, %v683
        %vm685 = vcmp.lt.s32.totalorder %v684, 0
        %v686 = vsub.s32 0, %v684
        %v687 = vsel %vm685, %v686, %v684
        %v688 = vclz %v687
        %v689 = vsub.s32 %v688, 2
        %vm690 = vcmp.gt.s32.totalorder 0, %v689
        %v691 = vsel %vm690, 0, %v689
        %v692 = vsub.s32 32, %v691
        %v693 = vshll.u32 %v684, %v691
        %v694 = vshrl.u32 %v676, %v692
        %v695 = vor.u32 %v693, %v694
        %v696 = vsub.s32 4294967266, %v691
        %v697 = vadd.s32 %v696, 127
        %v698 = vshll.u32 %v697, 23
        %v699 = vor.u32 4788187, %v698
        %v700 = vand.u32 2147483647, %v699
        %v702 = vcvt.s32.f32 %v695
        %v703 = vmul.f32 %v702, %v700
        %v704 = vxor.u32 %v703, 2147483648
        %v705 = vsel %vm622, %v704, %v703
        %v706 = vsub.s32 4, %v682
        %v707 = vsel %vm622, %v706, %v682
        %v708 = vsel %vm621, %v309, %v705
        %v709 = vsel %vm621, 0, %v707
        %v710 = vcosq.f32.pop %v708
        %v711 = vsinq.f32.pop %v708
        %vm712 = vweird.f32 %v309
        %v713 = vadd.s32 %v709, 3
        %v714 = vand.u32 %v713, 3
        %vm715 = vcmp.lt.s32.totalorder %v714, 2
        %vm716 = vcmp.eq.s32.totalorder %v714, 0
        %v717 = vxor.u32 %v711, 2147483648
        %v718 = vsel %vm716, %v710, %v717
        %vm719 = vcmp.eq.s32.totalorder %v714, 2
        %v720 = vxor.u32 %v710, 2147483648
        %v721 = vsel %vm719, %v720, %v711
        %v722 = vsel %vm715, %v718, %v721
        %v723 = vsel %vm712, nan, %v722
        %v724 = vmul.f32 %v412, 0.48860252
        %v725 = vmul.f32 %v516, -0.48860252
        %v726 = vmul.f32 %v725, %v619
        %v727 = vmul.f32 %v725, %v723
        %v728 = vmul.f32 %v412, 3.0
        %v729 = vmul.f32 %v728, %v412
        %v730 = vsub.f32 %v729, 1.0
        %v731 = vmul.f32 %v730, 0.31539157
        %v732 = vmul.f32 %v516, -1.0925485
        %v733 = vmul.f32 %v732, %v412
        %v734 = vmul.f32 %v733, %v619
        %v735 = vmul.f32 %v516, 0.54627424
        %v736 = vmul.f32 %v735, %v516
        %v737 = vmul.f32 %v619, %v619
        %v738 = vmul.f32 %v723, %v723
        %v739 = vsub.f32 %v737, %v738
        %v740 = vmul.f32 %v736, %v739
        %v741 = vmul.f32 %v723, 2.0
        %v742 = vmul.f32 %v741, %v619
        %v743 = vmul.f32 %v736, %v742
        %v744 = vmul.f32 %v733, %v723
        %746 = vset.pattern.permute.xlu0 0
        %747 = vperm.xlu0 %746, %v300
        %v748 = vpop.permute.xlu0 %747
        %v751 = vlaneseq
        %v752 = vshrl.u32 %v751, 7
        %v753 = vsub.s32 0, %v752
        %v754 = vrot.slane %v307, %v753
        %v755 = vlaneseq
        %v756 = vshrl.u32 %v755, 7
        %v757 = vsub.s32 1, %v756
        %v758 = vrot.slane %v307, %v757
        %v761 = vmul.f32 %v748, %v754
        %v762 = vmul.f32 %v748, %v758
        %v763 = vand.u32 2147483647, %v761
        %vm764 = vcmp.le.f32.partialorder %v763, 0.7853982
        %vm765 = vcmp.lt.s32.totalorder %v761, 0
        %v766 = vand.u32 %v761, 2139095040
        %v767 = vshrl.u32 %v766, 23
        %v768 = vsub.s32 %v767, 127
        %v769 = vand.u32 2147483647, %v761
        %v770 = vand.u32 %v769, 8388607
        %v771 = vor.u32 %v770, 8388608
        %v772 = vsub.s32 0, %v771
        %v773 = vadd.s32 %v768, 1
        %vm774 = vcmp.gt.s32.totalorder %v773, 0
        %v775 = vsel %vm774, %v773, 0
        %v776 = vshrl.u32 %v775, 5
        %v777 = vand.u32 %v775, 31
        %v778 = vsub.s32 32, %v777
        %v779 = vshrl.u32 683565275, %v778
        %v780 = vshll.u32 683565275, %v777
        %v781 = vshrl.u32 2475754826, %v778
        %v782 = vor.u32 %v780, %v781
        %v783 = vshll.u32 2475754826, %v777
        %v784 = vshrl.u32 2131351028, %v778
        %v785 = vor.u32 %v783, %v784
        %v786 = vshll.u32 2131351028, %v777
        %v787 = vshrl.u32 2102212464, %v778
        %v788 = vor.u32 %v786, %v787
        %v789 = vshll.u32 2102212464, %v777
        %v790 = vshrl.u32 920167782, %v778
        %v791 = vor.u32 %v789, %v790
        %v792 = vshll.u32 920167782, %v777
        %v793 = vshrl.u32 1326507024, %v778
        %v794 = vor.u32 %v792, %v793
        %vm795 = vcmp.lt.s32.totalorder %v776, 1
        %vm796 = vcmp.lt.s32.totalorder %v776, 2
        %vm797 = vcmp.lt.s32.totalorder %v776, 3
        %vm798 = vcmp.lt.s32.totalorder %v776, 4
        %v799 = vsel %vm795, %v779, %v782
        %v800 = vsel %vm798, %v788, 2102212464
        %v801 = vsel %vm797, %v785, %v800
        %v802 = vsel %vm796, %v799, %v801
        %v803 = vsel %vm795, %v782, %v785
        %v804 = vsel %vm798, %v791, 920167782
        %v805 = vsel %vm797, %v788, %v804
        %v806 = vsel %vm796, %v803, %v805
        %v807 = vsel %vm795, %v785, %v788
        %v808 = vsel %vm798, %v794, 1326507024
        %v809 = vsel %vm797, %v791, %v808
        %v810 = vsel %vm796, %v807, %v809
        %v811 = vshll.u32 %v771, 8
        %v812 = vmul.u32.u64.compose %v811, %v810
        %v813 = vextract.low.u32 %v812
        %v814 = vextract.high.u32 %v812
        %v815 = vmul.u32.u64.compose %v811, %v806
        %v816 = vextract.low.u32 %v815
        %v817 = vextract.high.u32 %v815
        %v818 = vmul.u32 %v811, %v802
        %v819 = vadd.s32 %v814, %v816
        %vm820 = vc.u32 %v814, %v816
        %v821 = vadd.s32 %v817, 1
        %v822 = vsel %vm820, %v821, %v817
        %v823 = vadd.s32 %v818, %v822
        %v824 = vadd.s32 %v823, 536870912
        %v825 = vshrl.u32 %v824, 30
        %v826 = vshll.u32 %v825, 30
        %v827 = vsub.s32 %v823, %v826
        %vm828 = vcmp.lt.s32.totalorder %v827, 0
        %v829 = vsub.s32 0, %v827
        %v830 = vsel %vm828, %v829, %v827
        %v831 = vclz %v830
        %v832 = vsub.s32 %v831, 2
        %vm833 = vcmp.gt.s32.totalorder 0, %v832
        %v834 = vsel %vm833, 0, %v832
        %v835 = vsub.s32 32, %v834
        %v836 = vshll.u32 %v827, %v834
        %v837 = vshrl.u32 %v819, %v835
        %v838 = vor.u32 %v836, %v837
        %v839 = vsub.s32 4294967266, %v834
        %v840 = vadd.s32 %v839, 127
        %v841 = vshll.u32 %v840, 23
        %v842 = vor.u32 4788187, %v841
        %v843 = vand.u32 2147483647, %v842
        %v845 = vcvt.s32.f32 %v838
        %v846 = vmul.f32 %v845, %v843
        %v847 = vxor.u32 %v846, 2147483648
        %v848 = vsel %vm765, %v847, %v846
        %v849 = vsub.s32 4, %v825
        %v850 = vsel %vm765, %v849, %v825
        %v851 = vsel %vm764, %v761, %v848
        %v852 = vsel %vm764, 0, %v850
        %v853 = vcosq.f32.pop %v851
        %v854 = vsinq.f32.pop %v851
        %vm855 = vweird.f32 %v761
        %v856 = vadd.s32 %v852, 3
        %v857 = vand.u32 %v856, 3
        %vm858 = vcmp.lt.s32.totalorder %v857, 2
        %vm859 = vcmp.eq.s32.totalorder %v857, 0
        %v860 = vxor.u32 %v854, 2147483648
        %v861 = vsel %vm859, %v853, %v860
        %vm862 = vcmp.eq.s32.totalorder %v857, 2
        %v863 = vxor.u32 %v853, 2147483648
        %v864 = vsel %vm862, %v863, %v854
        %v865 = vsel %vm858, %v861, %v864
        %v866 = vsel %vm855, nan, %v865
        %v867 = vand.u32 2147483647, %v762
        %vm868 = vcmp.le.f32.partialorder %v867, 0.7853982
        %vm869 = vcmp.lt.s32.totalorder %v762, 0
        %v870 = vand.u32 %v762, 2139095040
        %v871 = vshrl.u32 %v870, 23
        %v872 = vsub.s32 %v871, 127
        %v873 = vand.u32 2147483647, %v762
        %v874 = vand.u32 %v873, 8388607
        %v875 = vor.u32 %v874, 8388608
        %v876 = vsub.s32 0, %v875
        %v877 = vadd.s32 %v872, 1
        %vm878 = vcmp.gt.s32.totalorder %v877, 0
        %v879 = vsel %vm878, %v877, 0
        %v880 = vshrl.u32 %v879, 5
        %v881 = vand.u32 %v879, 31
        %v882 = vsub.s32 32, %v881
        %v883 = vshrl.u32 683565275, %v882
        %v884 = vshll.u32 683565275, %v881
        %v885 = vshrl.u32 2475754826, %v882
        %v886 = vor.u32 %v884, %v885
        %v887 = vshll.u32 2475754826, %v881
        %v888 = vshrl.u32 2131351028, %v882
        %v889 = vor.u32 %v887, %v888
        %v890 = vshll.u32 2131351028, %v881
        %v891 = vshrl.u32 2102212464, %v882
        %v892 = vor.u32 %v890, %v891
        %v893 = vshll.u32 2102212464, %v881
        %v894 = vshrl.u32 920167782, %v882
        %v895 = vor.u32 %v893, %v894
        %v896 = vshll.u32 920167782, %v881
        %v897 = vshrl.u32 1326507024, %v882
        %v898 = vor.u32 %v896, %v897
        %vm899 = vcmp.lt.s32.totalorder %v880, 1
        %vm900 = vcmp.lt.s32.totalorder %v880, 2
        %vm901 = vcmp.lt.s32.totalorder %v880, 3
        %vm902 = vcmp.lt.s32.totalorder %v880, 4
        %v903 = vsel %vm899, %v883, %v886
        %v904 = vsel %vm902, %v892, 2102212464
        %v905 = vsel %vm901, %v889, %v904
        %v906 = vsel %vm900, %v903, %v905
        %v907 = vsel %vm899, %v886, %v889
        %v908 = vsel %vm902, %v895, 920167782
        %v909 = vsel %vm901, %v892, %v908
        %v910 = vsel %vm900, %v907, %v909
        %v911 = vsel %vm899, %v889, %v892
        %v912 = vsel %vm902, %v898, 1326507024
        %v913 = vsel %vm901, %v895, %v912
        %v914 = vsel %vm900, %v911, %v913
        %v915 = vshll.u32 %v875, 8
        %v916 = vmul.u32.u64.compose %v915, %v914
        %v917 = vextract.low.u32 %v916
        %v918 = vextract.high.u32 %v916
        %v919 = vmul.u32.u64.compose %v915, %v910
        %v920 = vextract.low.u32 %v919
        %v921 = vextract.high.u32 %v919
        %v922 = vmul.u32 %v915, %v906
        %v923 = vadd.s32 %v918, %v920
        %vm924 = vc.u32 %v918, %v920
        %v925 = vadd.s32 %v921, 1
        %v926 = vsel %vm924, %v925, %v921
        %v927 = vadd.s32 %v922, %v926
        %v928 = vadd.s32 %v927, 536870912
        %v929 = vshrl.u32 %v928, 30
        %v930 = vshll.u32 %v929, 30
        %v931 = vsub.s32 %v927, %v930
        %vm932 = vcmp.lt.s32.totalorder %v931, 0
        %v933 = vsub.s32 0, %v931
        %v934 = vsel %vm932, %v933, %v931
        %v935 = vclz %v934
        %v936 = vsub.s32 %v935, 2
        %vm937 = vcmp.gt.s32.totalorder 0, %v936
        %v938 = vsel %vm937, 0, %v936
        %v939 = vsub.s32 32, %v938
        %v940 = vshll.u32 %v931, %v938
        %v941 = vshrl.u32 %v923, %v939
        %v942 = vor.u32 %v940, %v941
        %v943 = vsub.s32 4294967266, %v938
        %v944 = vadd.s32 %v943, 127
        %v945 = vshll.u32 %v944, 23
        %v946 = vor.u32 4788187, %v945
        %v947 = vand.u32 2147483647, %v946
        %v949 = vcvt.s32.f32 %v942
        %v950 = vmul.f32 %v949, %v947
        %v951 = vxor.u32 %v950, 2147483648
        %v952 = vsel %vm869, %v951, %v950
        %v953 = vsub.s32 4, %v929
        %v954 = vsel %vm869, %v953, %v929
        %v955 = vsel %vm868, %v762, %v952
        %v956 = vsel %vm868, 0, %v954
        %v957 = vcosq.f32.pop %v955
        %v958 = vsinq.f32.pop %v955
        %vm959 = vweird.f32 %v762
        %v960 = vadd.s32 %v956, 3
        %v961 = vand.u32 %v960, 3
        %vm962 = vcmp.lt.s32.totalorder %v961, 2
        %vm963 = vcmp.eq.s32.totalorder %v961, 0
        %v964 = vxor.u32 %v958, 2147483648
        %v965 = vsel %vm963, %v957, %v964
        %vm966 = vcmp.eq.s32.totalorder %v961, 2
        %v967 = vxor.u32 %v957, 2147483648
        %v968 = vsel %vm966, %v967, %v958
        %v969 = vsel %vm962, %v965, %v968
        %v970 = vsel %vm959, nan, %v969
        %v971 = vrcp.pop %v761
        %v972 = vrcp.pop %v762
        %v973 = vmul.f32 %v761, %v971
        %v974 = vmul.f32 %v762, %v972
        %v975 = vsub.f32 2.0, %v973
        %v976 = vsub.f32 2.0, %v974
        %v977 = vmul.f32 %v971, %v975
        %v978 = vmul.f32 %v972, %v976
        %v979 = vmul.f32 %v866, %v977
        %v980 = vmul.f32 %v970, %v978
        %982 = vset.pattern.permute.xlu0 0
        %983 = vperm.xlu0 %982, %v303
        %v984 = vpop.permute.xlu0 %983
        %v986 = vmul.f32 %v984, %v979
        %v987 = vmul.f32 %v984, %v980
        %v988 = vmul.f32 %v986, 0.2820948
        %v989 = vmul.f32 %v987, 0.2820948
        %v991 = vlaneseq
        %v992 = vshrl.u32 %v991, 7
        %v993 = vsub.s32 0, %v992
        %v994 = vrot.slane %v727, %v993
        %v995 = vlaneseq
        %v996 = vshrl.u32 %v995, 7
        %v997 = vsub.s32 1, %v996
        %v998 = vrot.slane %v727, %v997
        %v1001 = vmul.f32 %v994, %v986
        %v1002 = vmul.f32 %v998, %v987
        %v1004 = vlaneseq
        %v1005 = vshrl.u32 %v1004, 7
        %v1006 = vsub.s32 0, %v1005
        %v1007 = vrot.slane %v740, %v1006
        %v1008 = vlaneseq
        %v1009 = vshrl.u32 %v1008, 7
        %v1010 = vsub.s32 1, %v1009
        %v1011 = vrot.slane %v740, %v1010
        %v1014 = vmul.f32 %v1007, %v986
        %v1015 = vmul.f32 %v1011, %v987
        %1017 = vset.pattern.permute.xlu0 0
        %1018 = vperm.xlu0 %1017, %v301
        %v1019 = vpop.permute.xlu0 %1018
        %v1021 = vmul.f32 %v1019, %v754
        %v1022 = vmul.f32 %v1019, %v758
        %v1023 = vand.u32 2147483647, %v1021
        %vm1024 = vcmp.le.f32.partialorder %v1023, 0.7853982
        %vm1025 = vcmp.lt.s32.totalorder %v1021, 0
        %v1026 = vand.u32 %v1021, 2139095040
        %v1027 = vshrl.u32 %v1026, 23
        %v1028 = vsub.s32 %v1027, 127
        %v1029 = vand.u32 2147483647, %v1021
        %v1030 = vand.u32 %v1029, 8388607
        %v1031 = vor.u32 %v1030, 8388608
        %v1032 = vsub.s32 0, %v1031
        %v1033 = vadd.s32 %v1028, 1
        %vm1034 = vcmp.gt.s32.totalorder %v1033, 0
        %v1035 = vsel %vm1034, %v1033, 0
        %v1036 = vshrl.u32 %v1035, 5
        %v1037 = vand.u32 %v1035, 31
        %v1038 = vsub.s32 32, %v1037
        %v1039 = vshrl.u32 683565275, %v1038
        %v1040 = vshll.u32 683565275, %v1037
        %v1041 = vshrl.u32 2475754826, %v1038
        %v1042 = vor.u32 %v1040, %v1041
        %v1043 = vshll.u32 2475754826, %v1037
        %v1044 = vshrl.u32 2131351028, %v1038
        %v1045 = vor.u32 %v1043, %v1044
        %v1046 = vshll.u32 2131351028, %v1037
        %v1047 = vshrl.u32 2102212464, %v1038
        %v1048 = vor.u32 %v1046, %v1047
        %v1049 = vshll.u32 2102212464, %v1037
        %v1050 = vshrl.u32 920167782, %v1038
        %v1051 = vor.u32 %v1049, %v1050
        %v1052 = vshll.u32 920167782, %v1037
        %v1053 = vshrl.u32 1326507024, %v1038
        %v1054 = vor.u32 %v1052, %v1053
        %vm1055 = vcmp.lt.s32.totalorder %v1036, 1
        %vm1056 = vcmp.lt.s32.totalorder %v1036, 2
        %vm1057 = vcmp.lt.s32.totalorder %v1036, 3
        %vm1058 = vcmp.lt.s32.totalorder %v1036, 4
        %v1059 = vsel %vm1055, %v1039, %v1042
        %v1060 = vsel %vm1058, %v1048, 2102212464
        %v1061 = vsel %vm1057, %v1045, %v1060
        %v1062 = vsel %vm1056, %v1059, %v1061
        %v1063 = vsel %vm1055, %v1042, %v1045
        %v1064 = vsel %vm1058, %v1051, 920167782
        %v1065 = vsel %vm1057, %v1048, %v1064
        %v1066 = vsel %vm1056, %v1063, %v1065
        %v1067 = vsel %vm1055, %v1045, %v1048
        %v1068 = vsel %vm1058, %v1054, 1326507024
        %v1069 = vsel %vm1057, %v1051, %v1068
        %v1070 = vsel %vm1056, %v1067, %v1069
        %v1071 = vshll.u32 %v1031, 8
        %v1072 = vmul.u32.u64.compose %v1071, %v1070
        %v1073 = vextract.low.u32 %v1072
        %v1074 = vextract.high.u32 %v1072
        %v1075 = vmul.u32.u64.compose %v1071, %v1066
        %v1076 = vextract.low.u32 %v1075
        %v1077 = vextract.high.u32 %v1075
        %v1078 = vmul.u32 %v1071, %v1062
        %v1079 = vadd.s32 %v1074, %v1076
        %vm1080 = vc.u32 %v1074, %v1076
        %v1081 = vadd.s32 %v1077, 1
        %v1082 = vsel %vm1080, %v1081, %v1077
        %v1083 = vadd.s32 %v1078, %v1082
        %v1084 = vadd.s32 %v1083, 536870912
        %v1085 = vshrl.u32 %v1084, 30
        %v1086 = vshll.u32 %v1085, 30
        %v1087 = vsub.s32 %v1083, %v1086
        %vm1088 = vcmp.lt.s32.totalorder %v1087, 0
        %v1089 = vsub.s32 0, %v1087
        %v1090 = vsel %vm1088, %v1089, %v1087
        %v1091 = vclz %v1090
        %v1092 = vsub.s32 %v1091, 2
        %vm1093 = vcmp.gt.s32.totalorder 0, %v1092
        %v1094 = vsel %vm1093, 0, %v1092
        %v1095 = vsub.s32 32, %v1094
        %v1096 = vshll.u32 %v1087, %v1094
        %v1097 = vshrl.u32 %v1079, %v1095
        %v1098 = vor.u32 %v1096, %v1097
        %v1099 = vsub.s32 4294967266, %v1094
        %v1100 = vadd.s32 %v1099, 127
        %v1101 = vshll.u32 %v1100, 23
        %v1102 = vor.u32 4788187, %v1101
        %v1103 = vand.u32 2147483647, %v1102
        %v1105 = vcvt.s32.f32 %v1098
        %v1106 = vmul.f32 %v1105, %v1103
        %v1107 = vxor.u32 %v1106, 2147483648
        %v1108 = vsel %vm1025, %v1107, %v1106
        %v1109 = vsub.s32 4, %v1085
        %v1110 = vsel %vm1025, %v1109, %v1085
        %v1111 = vsel %vm1024, %v1021, %v1108
        %v1112 = vsel %vm1024, 0, %v1110
        %v1113 = vcosq.f32.pop %v1111
        %v1114 = vsinq.f32.pop %v1111
        %vm1115 = vweird.f32 %v1021
        %v1116 = vadd.s32 %v1112, 3
        %v1117 = vand.u32 %v1116, 3
        %vm1118 = vcmp.lt.s32.totalorder %v1117, 2
        %vm1119 = vcmp.eq.s32.totalorder %v1117, 0
        %v1120 = vxor.u32 %v1114, 2147483648
        %v1121 = vsel %vm1119, %v1113, %v1120
        %vm1122 = vcmp.eq.s32.totalorder %v1117, 2
        %v1123 = vxor.u32 %v1113, 2147483648
        %v1124 = vsel %vm1122, %v1123, %v1114
        %v1125 = vsel %vm1118, %v1121, %v1124
        %v1126 = vsel %vm1115, nan, %v1125
        %v1127 = vand.u32 2147483647, %v1022
        %vm1128 = vcmp.le.f32.partialorder %v1127, 0.7853982
        %vm1129 = vcmp.lt.s32.totalorder %v1022, 0
        %v1130 = vand.u32 %v1022, 2139095040
        %v1131 = vshrl.u32 %v1130, 23
        %v1132 = vsub.s32 %v1131, 127
        %v1133 = vand.u32 2147483647, %v1022
        %v1134 = vand.u32 %v1133, 8388607
        %v1135 = vor.u32 %v1134, 8388608
        %v1136 = vsub.s32 0, %v1135
        %v1137 = vadd.s32 %v1132, 1
        %vm1138 = vcmp.gt.s32.totalorder %v1137, 0
        %v1139 = vsel %vm1138, %v1137, 0
        %v1140 = vshrl.u32 %v1139, 5
        %v1141 = vand.u32 %v1139, 31
        %v1142 = vsub.s32 32, %v1141
        %v1143 = vshrl.u32 683565275, %v1142
        %v1144 = vshll.u32 683565275, %v1141
        %v1145 = vshrl.u32 2475754826, %v1142
        %v1146 = vor.u32 %v1144, %v1145
        %v1147 = vshll.u32 2475754826, %v1141
        %v1148 = vshrl.u32 2131351028, %v1142
        %v1149 = vor.u32 %v1147, %v1148
        %v1150 = vshll.u32 2131351028, %v1141
        %v1151 = vshrl.u32 2102212464, %v1142
        %v1152 = vor.u32 %v1150, %v1151
        %v1153 = vshll.u32 2102212464, %v1141
        %v1154 = vshrl.u32 920167782, %v1142
        %v1155 = vor.u32 %v1153, %v1154
        %v1156 = vshll.u32 920167782, %v1141
        %v1157 = vshrl.u32 1326507024, %v1142
        %v1158 = vor.u32 %v1156, %v1157
        %vm1159 = vcmp.lt.s32.totalorder %v1140, 1
        %vm1160 = vcmp.lt.s32.totalorder %v1140, 2
        %vm1161 = vcmp.lt.s32.totalorder %v1140, 3
        %vm1162 = vcmp.lt.s32.totalorder %v1140, 4
        %v1163 = vsel %vm1159, %v1143, %v1146
        %v1164 = vsel %vm1162, %v1152, 2102212464
        %v1165 = vsel %vm1161, %v1149, %v1164
        %v1166 = vsel %vm1160, %v1163, %v1165
        %v1167 = vsel %vm1159, %v1146, %v1149
        %v1168 = vsel %vm1162, %v1155, 920167782
        %v1169 = vsel %vm1161, %v1152, %v1168
        %v1170 = vsel %vm1160, %v1167, %v1169
        %v1171 = vsel %vm1159, %v1149, %v1152
        %v1172 = vsel %vm1162, %v1158, 1326507024
        %v1173 = vsel %vm1161, %v1155, %v1172
        %v1174 = vsel %vm1160, %v1171, %v1173
        %v1175 = vshll.u32 %v1135, 8
        %v1176 = vmul.u32.u64.compose %v1175, %v1174
        %v1177 = vextract.low.u32 %v1176
        %v1178 = vextract.high.u32 %v1176
        %v1179 = vmul.u32.u64.compose %v1175, %v1170
        %v1180 = vextract.low.u32 %v1179
        %v1181 = vextract.high.u32 %v1179
        %v1182 = vmul.u32 %v1175, %v1166
        %v1183 = vadd.s32 %v1178, %v1180
        %vm1184 = vc.u32 %v1178, %v1180
        %v1185 = vadd.s32 %v1181, 1
        %v1186 = vsel %vm1184, %v1185, %v1181
        %v1187 = vadd.s32 %v1182, %v1186
        %v1188 = vadd.s32 %v1187, 536870912
        %v1189 = vshrl.u32 %v1188, 30
        %v1190 = vshll.u32 %v1189, 30
        %v1191 = vsub.s32 %v1187, %v1190
        %vm1192 = vcmp.lt.s32.totalorder %v1191, 0
        %v1193 = vsub.s32 0, %v1191
        %v1194 = vsel %vm1192, %v1193, %v1191
        %v1195 = vclz %v1194
        %v1196 = vsub.s32 %v1195, 2
        %vm1197 = vcmp.gt.s32.totalorder 0, %v1196
        %v1198 = vsel %vm1197, 0, %v1196
        %v1199 = vsub.s32 32, %v1198
        %v1200 = vshll.u32 %v1191, %v1198
        %v1201 = vshrl.u32 %v1183, %v1199
        %v1202 = vor.u32 %v1200, %v1201
        %v1203 = vsub.s32 4294967266, %v1198
        %v1204 = vadd.s32 %v1203, 127
        %v1205 = vshll.u32 %v1204, 23
        %v1206 = vor.u32 4788187, %v1205
        %v1207 = vand.u32 2147483647, %v1206
        %v1209 = vcvt.s32.f32 %v1202
        %v1210 = vmul.f32 %v1209, %v1207
        %v1211 = vxor.u32 %v1210, 2147483648
        %v1212 = vsel %vm1129, %v1211, %v1210
        %v1213 = vsub.s32 4, %v1189
        %v1214 = vsel %vm1129, %v1213, %v1189
        %v1215 = vsel %vm1128, %v1022, %v1212
        %v1216 = vsel %vm1128, 0, %v1214
        %v1217 = vcosq.f32.pop %v1215
        %v1218 = vsinq.f32.pop %v1215
        %vm1219 = vweird.f32 %v1022
        %v1220 = vadd.s32 %v1216, 3
        %v1221 = vand.u32 %v1220, 3
        %vm1222 = vcmp.lt.s32.totalorder %v1221, 2
        %vm1223 = vcmp.eq.s32.totalorder %v1221, 0
        %v1224 = vxor.u32 %v1218, 2147483648
        %v1225 = vsel %vm1223, %v1217, %v1224
        %vm1226 = vcmp.eq.s32.totalorder %v1221, 2
        %v1227 = vxor.u32 %v1217, 2147483648
        %v1228 = vsel %vm1226, %v1227, %v1218
        %v1229 = vsel %vm1222, %v1225, %v1228
        %v1230 = vsel %vm1219, nan, %v1229
        %v1231 = vrcp.pop %v1021
        %v1232 = vrcp.pop %v1022
        %v1233 = vmul.f32 %v1021, %v1231
        %v1234 = vmul.f32 %v1022, %v1232
        %v1235 = vsub.f32 2.0, %v1233
        %v1236 = vsub.f32 2.0, %v1234
        %v1237 = vmul.f32 %v1231, %v1235
        %v1238 = vmul.f32 %v1232, %v1236
        %v1239 = vand.u32 2147483647, %v1021
        %vm1240 = vcmp.le.f32.partialorder %v1239, 0.7853982
        %vm1241 = vcmp.lt.s32.totalorder %v1021, 0
        %v1242 = vand.u32 %v1021, 2139095040
        %v1243 = vshrl.u32 %v1242, 23
        %v1244 = vsub.s32 %v1243, 127
        %v1245 = vand.u32 2147483647, %v1021
        %v1246 = vand.u32 %v1245, 8388607
        %v1247 = vor.u32 %v1246, 8388608
        %v1248 = vsub.s32 0, %v1247
        %v1249 = vadd.s32 %v1244, 1
        %vm1250 = vcmp.gt.s32.totalorder %v1249, 0
        %v1251 = vsel %vm1250, %v1249, 0
        %v1252 = vshrl.u32 %v1251, 5
        %v1253 = vand.u32 %v1251, 31
        %v1254 = vsub.s32 32, %v1253
        %v1255 = vshrl.u32 683565275, %v1254
        %v1256 = vshll.u32 683565275, %v1253
        %v1257 = vshrl.u32 2475754826, %v1254
        %v1258 = vor.u32 %v1256, %v1257
        %v1259 = vshll.u32 2475754826, %v1253
        %v1260 = vshrl.u32 2131351028, %v1254
        %v1261 = vor.u32 %v1259, %v1260
        %v1262 = vshll.u32 2131351028, %v1253
        %v1263 = vshrl.u32 2102212464, %v1254
        %v1264 = vor.u32 %v1262, %v1263
        %v1265 = vshll.u32 2102212464, %v1253
        %v1266 = vshrl.u32 920167782, %v1254
        %v1267 = vor.u32 %v1265, %v1266
        %v1268 = vshll.u32 920167782, %v1253
        %v1269 = vshrl.u32 1326507024, %v1254
        %v1270 = vor.u32 %v1268, %v1269
        %vm1271 = vcmp.lt.s32.totalorder %v1252, 1
        %vm1272 = vcmp.lt.s32.totalorder %v1252, 2
        %vm1273 = vcmp.lt.s32.totalorder %v1252, 3
        %vm1274 = vcmp.lt.s32.totalorder %v1252, 4
        %v1275 = vsel %vm1271, %v1255, %v1258
        %v1276 = vsel %vm1274, %v1264, 2102212464
        %v1277 = vsel %vm1273, %v1261, %v1276
        %v1278 = vsel %vm1272, %v1275, %v1277
        %v1279 = vsel %vm1271, %v1258, %v1261
        %v1280 = vsel %vm1274, %v1267, 920167782
        %v1281 = vsel %vm1273, %v1264, %v1280
        %v1282 = vsel %vm1272, %v1279, %v1281
        %v1283 = vsel %vm1271, %v1261, %v1264
        %v1284 = vsel %vm1274, %v1270, 1326507024
        %v1285 = vsel %vm1273, %v1267, %v1284
        %v1286 = vsel %vm1272, %v1283, %v1285
        %v1287 = vshll.u32 %v1247, 8
        %v1288 = vmul.u32.u64.compose %v1287, %v1286
        %v1289 = vextract.low.u32 %v1288
        %v1290 = vextract.high.u32 %v1288
        %v1291 = vmul.u32.u64.compose %v1287, %v1282
        %v1292 = vextract.low.u32 %v1291
        %v1293 = vextract.high.u32 %v1291
        %v1294 = vmul.u32 %v1287, %v1278
        %v1295 = vadd.s32 %v1290, %v1292
        %vm1296 = vc.u32 %v1290, %v1292
        %v1297 = vadd.s32 %v1293, 1
        %v1298 = vsel %vm1296, %v1297, %v1293
        %v1299 = vadd.s32 %v1294, %v1298
        %v1300 = vadd.s32 %v1299, 536870912
        %v1301 = vshrl.u32 %v1300, 30
        %v1302 = vshll.u32 %v1301, 30
        %v1303 = vsub.s32 %v1299, %v1302
        %vm1304 = vcmp.lt.s32.totalorder %v1303, 0
        %v1305 = vsub.s32 0, %v1303
        %v1306 = vsel %vm1304, %v1305, %v1303
        %v1307 = vclz %v1306
        %v1308 = vsub.s32 %v1307, 2
        %vm1309 = vcmp.gt.s32.totalorder 0, %v1308
        %v1310 = vsel %vm1309, 0, %v1308
        %v1311 = vsub.s32 32, %v1310
        %v1312 = vshll.u32 %v1303, %v1310
        %v1313 = vshrl.u32 %v1295, %v1311
        %v1314 = vor.u32 %v1312, %v1313
        %v1315 = vsub.s32 4294967266, %v1310
        %v1316 = vadd.s32 %v1315, 127
        %v1317 = vshll.u32 %v1316, 23
        %v1318 = vor.u32 4788187, %v1317
        %v1319 = vand.u32 2147483647, %v1318
        %v1321 = vcvt.s32.f32 %v1314
        %v1322 = vmul.f32 %v1321, %v1319
        %v1323 = vxor.u32 %v1322, 2147483648
        %v1324 = vsel %vm1241, %v1323, %v1322
        %v1325 = vsub.s32 4, %v1301
        %v1326 = vsel %vm1241, %v1325, %v1301
        %v1327 = vsel %vm1240, %v1021, %v1324
        %v1328 = vsel %vm1240, 0, %v1326
        %v1329 = vcosq.f32.pop %v1327
        %v1330 = vsinq.f32.pop %v1327
        %vm1331 = vweird.f32 %v1021
        %v1332 = vand.u32 %v1328, 3
        %vm1333 = vcmp.lt.s32.totalorder %v1332, 2
        %vm1334 = vcmp.eq.s32.totalorder %v1332, 0
        %v1335 = vxor.u32 %v1330, 2147483648
        %v1336 = vsel %vm1334, %v1329, %v1335
        %vm1337 = vcmp.eq.s32.totalorder %v1332, 2
        %v1338 = vxor.u32 %v1329, 2147483648
        %v1339 = vsel %vm1337, %v1338, %v1330
        %v1340 = vsel %vm1333, %v1336, %v1339
        %v1341 = vsel %vm1331, nan, %v1340
        %v1342 = vand.u32 2147483647, %v1022
        %vm1343 = vcmp.le.f32.partialorder %v1342, 0.7853982
        %vm1344 = vcmp.lt.s32.totalorder %v1022, 0
        %v1345 = vand.u32 %v1022, 2139095040
        %v1346 = vshrl.u32 %v1345, 23
        %v1347 = vsub.s32 %v1346, 127
        %v1348 = vand.u32 2147483647, %v1022
        %v1349 = vand.u32 %v1348, 8388607
        %v1350 = vor.u32 %v1349, 8388608
        %v1351 = vsub.s32 0, %v1350
        %v1352 = vadd.s32 %v1347, 1
        %vm1353 = vcmp.gt.s32.totalorder %v1352, 0
        %v1354 = vsel %vm1353, %v1352, 0
        %v1355 = vshrl.u32 %v1354, 5
        %v1356 = vand.u32 %v1354, 31
        %v1357 = vsub.s32 32, %v1356
        %v1358 = vshrl.u32 683565275, %v1357
        %v1359 = vshll.u32 683565275, %v1356
        %v1360 = vshrl.u32 2475754826, %v1357
        %v1361 = vor.u32 %v1359, %v1360
        %v1362 = vshll.u32 2475754826, %v1356
        %v1363 = vshrl.u32 2131351028, %v1357
        %v1364 = vor.u32 %v1362, %v1363
        %v1365 = vshll.u32 2131351028, %v1356
        %v1366 = vshrl.u32 2102212464, %v1357
        %v1367 = vor.u32 %v1365, %v1366
        %v1368 = vshll.u32 2102212464, %v1356
        %v1369 = vshrl.u32 920167782, %v1357
        %v1370 = vor.u32 %v1368, %v1369
        %v1371 = vshll.u32 920167782, %v1356
        %v1372 = vshrl.u32 1326507024, %v1357
        %v1373 = vor.u32 %v1371, %v1372
        %vm1374 = vcmp.lt.s32.totalorder %v1355, 1
        %vm1375 = vcmp.lt.s32.totalorder %v1355, 2
        %vm1376 = vcmp.lt.s32.totalorder %v1355, 3
        %vm1377 = vcmp.lt.s32.totalorder %v1355, 4
        %v1378 = vsel %vm1374, %v1358, %v1361
        %v1379 = vsel %vm1377, %v1367, 2102212464
        %v1380 = vsel %vm1376, %v1364, %v1379
        %v1381 = vsel %vm1375, %v1378, %v1380
        %v1382 = vsel %vm1374, %v1361, %v1364
        %v1383 = vsel %vm1377, %v1370, 920167782
        %v1384 = vsel %vm1376, %v1367, %v1383
        %v1385 = vsel %vm1375, %v1382, %v1384
        %v1386 = vsel %vm1374, %v1364, %v1367
        %v1387 = vsel %vm1377, %v1373, 1326507024
        %v1388 = vsel %vm1376, %v1370, %v1387
        %v1389 = vsel %vm1375, %v1386, %v1388
        %v1390 = vshll.u32 %v1350, 8
        %v1391 = vmul.u32.u64.compose %v1390, %v1389
        %v1392 = vextract.low.u32 %v1391
        %v1393 = vextract.high.u32 %v1391
        %v1394 = vmul.u32.u64.compose %v1390, %v1385
        %v1395 = vextract.low.u32 %v1394
        %v1396 = vextract.high.u32 %v1394
        %v1397 = vmul.u32 %v1390, %v1381
        %v1398 = vadd.s32 %v1393, %v1395
        %vm1399 = vc.u32 %v1393, %v1395
        %v1400 = vadd.s32 %v1396, 1
        %v1401 = vsel %vm1399, %v1400, %v1396
        %v1402 = vadd.s32 %v1397, %v1401
        %v1403 = vadd.s32 %v1402, 536870912
        %v1404 = vshrl.u32 %v1403, 30
        %v1405 = vshll.u32 %v1404, 30
        %v1406 = vsub.s32 %v1402, %v1405
        %vm1407 = vcmp.lt.s32.totalorder %v1406, 0
        %v1408 = vsub.s32 0, %v1406
        %v1409 = vsel %vm1407, %v1408, %v1406
        %v1410 = vclz %v1409
        %v1411 = vsub.s32 %v1410, 2
        %vm1412 = vcmp.gt.s32.totalorder 0, %v1411
        %v1413 = vsel %vm1412, 0, %v1411
        %v1414 = vsub.s32 32, %v1413
        %v1415 = vshll.u32 %v1406, %v1413
        %v1416 = vshrl.u32 %v1398, %v1414
        %v1417 = vor.u32 %v1415, %v1416
        %v1418 = vsub.s32 4294967266, %v1413
        %v1419 = vadd.s32 %v1418, 127
        %v1420 = vshll.u32 %v1419, 23
        %v1421 = vor.u32 4788187, %v1420
        %v1422 = vand.u32 2147483647, %v1421
        %v1424 = vcvt.s32.f32 %v1417
        %v1425 = vmul.f32 %v1424, %v1422
        %v1426 = vxor.u32 %v1425, 2147483648
        %v1427 = vsel %vm1344, %v1426, %v1425
        %v1428 = vsub.s32 4, %v1404
        %v1429 = vsel %vm1344, %v1428, %v1404
        %v1430 = vsel %vm1343, %v1022, %v1427
        %v1431 = vsel %vm1343, 0, %v1429
        %v1432 = vcosq.f32.pop %v1430
        %v1433 = vsinq.f32.pop %v1430
        %vm1434 = vweird.f32 %v1022
        %v1435 = vand.u32 %v1431, 3
        %vm1436 = vcmp.lt.s32.totalorder %v1435, 2
        %vm1437 = vcmp.eq.s32.totalorder %v1435, 0
        %v1438 = vxor.u32 %v1433, 2147483648
        %v1439 = vsel %vm1437, %v1432, %v1438
        %vm1440 = vcmp.eq.s32.totalorder %v1435, 2
        %v1441 = vxor.u32 %v1432, 2147483648
        %v1442 = vsel %vm1440, %v1441, %v1433
        %v1443 = vsel %vm1436, %v1439, %v1442
        %v1444 = vsel %vm1434, nan, %v1443
        %v1445 = vmul.f32 %v1126, %v1237
        %v1446 = vmul.f32 %v1230, %v1238
        %v1447 = vmul.f32 %v1445, %v1237
        %v1448 = vmul.f32 %v1446, %v1238
        %v1449 = vmul.f32 %v1341, %v1237
        %v1450 = vmul.f32 %v1444, %v1238
        %v1451 = vsub.f32 %v1447, %v1449
        %v1452 = vsub.f32 %v1448, %v1450
        %1454 = vset.pattern.permute.xlu0 0
        %1455 = vperm.xlu0 %1454, %v304
        %v1456 = vpop.permute.xlu0 %1455
        %v1458 = vmul.f32 %v1456, %v1451
        %v1459 = vmul.f32 %v1456, %v1452
        %v1461 = vlaneseq
        %v1462 = vshrl.u32 %v1461, 7
        %v1463 = vsub.s32 0, %v1462
        %v1464 = vrot.slane %v724, %v1463
        %v1465 = vlaneseq
        %v1466 = vshrl.u32 %v1465, 7
        %v1467 = vsub.s32 1, %v1466
        %v1468 = vrot.slane %v724, %v1467
        %v1471 = vmul.f32 %v1464, %v1458
        %v1472 = vmul.f32 %v1468, %v1459
        %v1474 = vlaneseq
        %v1475 = vshrl.u32 %v1474, 7
        %v1476 = vsub.s32 0, %v1475
        %v1477 = vrot.slane %v731, %v1476
        %v1478 = vlaneseq
        %v1479 = vshrl.u32 %v1478, 7
        %v1480 = vsub.s32 1, %v1479
        %v1481 = vrot.slane %v731, %v1480
        %v1484 = vmul.f32 %v1477, %v1458
        %v1485 = vmul.f32 %v1481, %v1459
        %v1487 = vlaneseq
        %v1488 = vshrl.u32 %v1487, 7
        %v1489 = vsub.s32 0, %v1488
        %v1490 = vrot.slane %v743, %v1489
        %v1491 = vlaneseq
        %v1492 = vshrl.u32 %v1491, 7
        %v1493 = vsub.s32 1, %v1492
        %v1494 = vrot.slane %v743, %v1493
        %v1497 = vmul.f32 %v1490, %v1458
        %v1498 = vmul.f32 %v1494, %v1459
        %1500 = vset.pattern.permute.xlu0 0
        %1501 = vperm.xlu0 %1500, %v302
        %v1502 = vpop.permute.xlu0 %1501
        %v1504 = vmul.f32 %v1502, %v754
        %v1505 = vmul.f32 %v1502, %v758
        %v1506 = vand.u32 2147483647, %v1504
        %vm1507 = vcmp.le.f32.partialorder %v1506, 0.7853982
        %vm1508 = vcmp.lt.s32.totalorder %v1504, 0
        %v1509 = vand.u32 %v1504, 2139095040
        %v1510 = vshrl.u32 %v1509, 23
        %v1511 = vsub.s32 %v1510, 127
        %v1512 = vand.u32 2147483647, %v1504
        %v1513 = vand.u32 %v1512, 8388607
        %v1514 = vor.u32 %v1513, 8388608
        %v1515 = vsub.s32 0, %v1514
        %v1516 = vadd.s32 %v1511, 1
        %vm1517 = vcmp.gt.s32.totalorder %v1516, 0
        %v1518 = vsel %vm1517, %v1516, 0
        %v1519 = vshrl.u32 %v1518, 5
        %v1520 = vand.u32 %v1518, 31
        %v1521 = vsub.s32 32, %v1520
        %v1522 = vshrl.u32 683565275, %v1521
        %v1523 = vshll.u32 683565275, %v1520
        %v1524 = vshrl.u32 2475754826, %v1521
        %v1525 = vor.u32 %v1523, %v1524
        %v1526 = vshll.u32 2475754826, %v1520
        %v1527 = vshrl.u32 2131351028, %v1521
        %v1528 = vor.u32 %v1526, %v1527
        %v1529 = vshll.u32 2131351028, %v1520
        %v1530 = vshrl.u32 2102212464, %v1521
        %v1531 = vor.u32 %v1529, %v1530
        %v1532 = vshll.u32 2102212464, %v1520
        %v1533 = vshrl.u32 920167782, %v1521
        %v1534 = vor.u32 %v1532, %v1533
        %v1535 = vshll.u32 920167782, %v1520
        %v1536 = vshrl.u32 1326507024, %v1521
        %v1537 = vor.u32 %v1535, %v1536
        %vm1538 = vcmp.lt.s32.totalorder %v1519, 1
        %vm1539 = vcmp.lt.s32.totalorder %v1519, 2
        %vm1540 = vcmp.lt.s32.totalorder %v1519, 3
        %vm1541 = vcmp.lt.s32.totalorder %v1519, 4
        %v1542 = vsel %vm1538, %v1522, %v1525
        %v1543 = vsel %vm1541, %v1531, 2102212464
        %v1544 = vsel %vm1540, %v1528, %v1543
        %v1545 = vsel %vm1539, %v1542, %v1544
        %v1546 = vsel %vm1538, %v1525, %v1528
        %v1547 = vsel %vm1541, %v1534, 920167782
        %v1548 = vsel %vm1540, %v1531, %v1547
        %v1549 = vsel %vm1539, %v1546, %v1548
        %v1550 = vsel %vm1538, %v1528, %v1531
        %v1551 = vsel %vm1541, %v1537, 1326507024
        %v1552 = vsel %vm1540, %v1534, %v1551
        %v1553 = vsel %vm1539, %v1550, %v1552
        %v1554 = vshll.u32 %v1514, 8
        %v1555 = vmul.u32.u64.compose %v1554, %v1553
        %v1556 = vextract.low.u32 %v1555
        %v1557 = vextract.high.u32 %v1555
        %v1558 = vmul.u32.u64.compose %v1554, %v1549
        %v1559 = vextract.low.u32 %v1558
        %v1560 = vextract.high.u32 %v1558
        %v1561 = vmul.u32 %v1554, %v1545
        %v1562 = vadd.s32 %v1557, %v1559
        %vm1563 = vc.u32 %v1557, %v1559
        %v1564 = vadd.s32 %v1560, 1
        %v1565 = vsel %vm1563, %v1564, %v1560
        %v1566 = vadd.s32 %v1561, %v1565
        %v1567 = vadd.s32 %v1566, 536870912
        %v1568 = vshrl.u32 %v1567, 30
        %v1569 = vshll.u32 %v1568, 30
        %v1570 = vsub.s32 %v1566, %v1569
        %vm1571 = vcmp.lt.s32.totalorder %v1570, 0
        %v1572 = vsub.s32 0, %v1570
        %v1573 = vsel %vm1571, %v1572, %v1570
        %v1574 = vclz %v1573
        %v1575 = vsub.s32 %v1574, 2
        %vm1576 = vcmp.gt.s32.totalorder 0, %v1575
        %v1577 = vsel %vm1576, 0, %v1575
        %v1578 = vsub.s32 32, %v1577
        %v1579 = vshll.u32 %v1570, %v1577
        %v1580 = vshrl.u32 %v1562, %v1578
        %v1581 = vor.u32 %v1579, %v1580
        %v1582 = vsub.s32 4294967266, %v1577
        %v1583 = vadd.s32 %v1582, 127
        %v1584 = vshll.u32 %v1583, 23
        %v1585 = vor.u32 4788187, %v1584
        %v1586 = vand.u32 2147483647, %v1585
        %v1588 = vcvt.s32.f32 %v1581
        %v1589 = vmul.f32 %v1588, %v1586
        %v1590 = vxor.u32 %v1589, 2147483648
        %v1591 = vsel %vm1508, %v1590, %v1589
        %v1592 = vsub.s32 4, %v1568
        %v1593 = vsel %vm1508, %v1592, %v1568
        %v1594 = vsel %vm1507, %v1504, %v1591
        %v1595 = vsel %vm1507, 0, %v1593
        %v1596 = vcosq.f32.pop %v1594
        %v1597 = vsinq.f32.pop %v1594
        %vm1598 = vweird.f32 %v1504
        %v1599 = vadd.s32 %v1595, 3
        %v1600 = vand.u32 %v1599, 3
        %vm1601 = vcmp.lt.s32.totalorder %v1600, 2
        %vm1602 = vcmp.eq.s32.totalorder %v1600, 0
        %v1603 = vxor.u32 %v1597, 2147483648
        %v1604 = vsel %vm1602, %v1596, %v1603
        %vm1605 = vcmp.eq.s32.totalorder %v1600, 2
        %v1606 = vxor.u32 %v1596, 2147483648
        %v1607 = vsel %vm1605, %v1606, %v1597
        %v1608 = vsel %vm1601, %v1604, %v1607
        %v1609 = vsel %vm1598, nan, %v1608
        %v1610 = vand.u32 2147483647, %v1505
        %vm1611 = vcmp.le.f32.partialorder %v1610, 0.7853982
        %vm1612 = vcmp.lt.s32.totalorder %v1505, 0
        %v1613 = vand.u32 %v1505, 2139095040
        %v1614 = vshrl.u32 %v1613, 23
        %v1615 = vsub.s32 %v1614, 127
        %v1616 = vand.u32 2147483647, %v1505
        %v1617 = vand.u32 %v1616, 8388607
        %v1618 = vor.u32 %v1617, 8388608
        %v1619 = vsub.s32 0, %v1618
        %v1620 = vadd.s32 %v1615, 1
        %vm1621 = vcmp.gt.s32.totalorder %v1620, 0
        %v1622 = vsel %vm1621, %v1620, 0
        %v1623 = vshrl.u32 %v1622, 5
        %v1624 = vand.u32 %v1622, 31
        %v1625 = vsub.s32 32, %v1624
        %v1626 = vshrl.u32 683565275, %v1625
        %v1627 = vshll.u32 683565275, %v1624
        %v1628 = vshrl.u32 2475754826, %v1625
        %v1629 = vor.u32 %v1627, %v1628
        %v1630 = vshll.u32 2475754826, %v1624
        %v1631 = vshrl.u32 2131351028, %v1625
        %v1632 = vor.u32 %v1630, %v1631
        %v1633 = vshll.u32 2131351028, %v1624
        %v1634 = vshrl.u32 2102212464, %v1625
        %v1635 = vor.u32 %v1633, %v1634
        %v1636 = vshll.u32 2102212464, %v1624
        %v1637 = vshrl.u32 920167782, %v1625
        %v1638 = vor.u32 %v1636, %v1637
        %v1639 = vshll.u32 920167782, %v1624
        %v1640 = vshrl.u32 1326507024, %v1625
        %v1641 = vor.u32 %v1639, %v1640
        %vm1642 = vcmp.lt.s32.totalorder %v1623, 1
        %vm1643 = vcmp.lt.s32.totalorder %v1623, 2
        %vm1644 = vcmp.lt.s32.totalorder %v1623, 3
        %vm1645 = vcmp.lt.s32.totalorder %v1623, 4
        %v1646 = vsel %vm1642, %v1626, %v1629
        %v1647 = vsel %vm1645, %v1635, 2102212464
        %v1648 = vsel %vm1644, %v1632, %v1647
        %v1649 = vsel %vm1643, %v1646, %v1648
        %v1650 = vsel %vm1642, %v1629, %v1632
        %v1651 = vsel %vm1645, %v1638, 920167782
        %v1652 = vsel %vm1644, %v1635, %v1651
        %v1653 = vsel %vm1643, %v1650, %v1652
        %v1654 = vsel %vm1642, %v1632, %v1635
        %v1655 = vsel %vm1645, %v1641, 1326507024
        %v1656 = vsel %vm1644, %v1638, %v1655
        %v1657 = vsel %vm1643, %v1654, %v1656
        %v1658 = vshll.u32 %v1618, 8
        %v1659 = vmul.u32.u64.compose %v1658, %v1657
        %v1660 = vextract.low.u32 %v1659
        %v1661 = vextract.high.u32 %v1659
        %v1662 = vmul.u32.u64.compose %v1658, %v1653
        %v1663 = vextract.low.u32 %v1662
        %v1664 = vextract.high.u32 %v1662
        %v1665 = vmul.u32 %v1658, %v1649
        %v1666 = vadd.s32 %v1661, %v1663
        %vm1667 = vc.u32 %v1661, %v1663
        %v1668 = vadd.s32 %v1664, 1
        %v1669 = vsel %vm1667, %v1668, %v1664
        %v1670 = vadd.s32 %v1665, %v1669
        %v1671 = vadd.s32 %v1670, 536870912
        %v1672 = vshrl.u32 %v1671, 30
        %v1673 = vshll.u32 %v1672, 30
        %v1674 = vsub.s32 %v1670, %v1673
        %vm1675 = vcmp.lt.s32.totalorder %v1674, 0
        %v1676 = vsub.s32 0, %v1674
        %v1677 = vsel %vm1675, %v1676, %v1674
        %v1678 = vclz %v1677
        %v1679 = vsub.s32 %v1678, 2
        %vm1680 = vcmp.gt.s32.totalorder 0, %v1679
        %v1681 = vsel %vm1680, 0, %v1679
        %v1682 = vsub.s32 32, %v1681
        %v1683 = vshll.u32 %v1674, %v1681
        %v1684 = vshrl.u32 %v1666, %v1682
        %v1685 = vor.u32 %v1683, %v1684
        %v1686 = vsub.s32 4294967266, %v1681
        %v1687 = vadd.s32 %v1686, 127
        %v1688 = vshll.u32 %v1687, 23
        %v1689 = vor.u32 4788187, %v1688
        %v1690 = vand.u32 2147483647, %v1689
        %v1692 = vcvt.s32.f32 %v1685
        %v1693 = vmul.f32 %v1692, %v1690
        %v1694 = vxor.u32 %v1693, 2147483648
        %v1695 = vsel %vm1612, %v1694, %v1693
        %v1696 = vsub.s32 4, %v1672
        %v1697 = vsel %vm1612, %v1696, %v1672
        %v1698 = vsel %vm1611, %v1505, %v1695
        %v1699 = vsel %vm1611, 0, %v1697
        %v1700 = vcosq.f32.pop %v1698
        %v1701 = vsinq.f32.pop %v1698
        %vm1702 = vweird.f32 %v1505
        %v1703 = vadd.s32 %v1699, 3
        %v1704 = vand.u32 %v1703, 3
        %vm1705 = vcmp.lt.s32.totalorder %v1704, 2
        %vm1706 = vcmp.eq.s32.totalorder %v1704, 0
        %v1707 = vxor.u32 %v1701, 2147483648
        %v1708 = vsel %vm1706, %v1700, %v1707
        %vm1709 = vcmp.eq.s32.totalorder %v1704, 2
        %v1710 = vxor.u32 %v1700, 2147483648
        %v1711 = vsel %vm1709, %v1710, %v1701
        %v1712 = vsel %vm1705, %v1708, %v1711
        %v1713 = vsel %vm1702, nan, %v1712
        %v1714 = vrcp.pop %v1504
        %v1715 = vrcp.pop %v1505
        %v1716 = vmul.f32 %v1504, %v1714
        %v1717 = vmul.f32 %v1505, %v1715
        %v1718 = vsub.f32 2.0, %v1716
        %v1719 = vsub.f32 2.0, %v1717
        %v1720 = vmul.f32 %v1714, %v1718
        %v1721 = vmul.f32 %v1715, %v1719
        %v1722 = vmul.f32 %v1609, %v1720
        %v1723 = vmul.f32 %v1713, %v1721
        %v1724 = vand.u32 2147483647, %v1504
        %vm1725 = vcmp.le.f32.partialorder %v1724, 0.7853982
        %vm1726 = vcmp.lt.s32.totalorder %v1504, 0
        %v1727 = vand.u32 %v1504, 2139095040
        %v1728 = vshrl.u32 %v1727, 23
        %v1729 = vsub.s32 %v1728, 127
        %v1730 = vand.u32 2147483647, %v1504
        %v1731 = vand.u32 %v1730, 8388607
        %v1732 = vor.u32 %v1731, 8388608
        %v1733 = vsub.s32 0, %v1732
        %v1734 = vadd.s32 %v1729, 1
        %vm1735 = vcmp.gt.s32.totalorder %v1734, 0
        %v1736 = vsel %vm1735, %v1734, 0
        %v1737 = vshrl.u32 %v1736, 5
        %v1738 = vand.u32 %v1736, 31
        %v1739 = vsub.s32 32, %v1738
        %v1740 = vshrl.u32 683565275, %v1739
        %v1741 = vshll.u32 683565275, %v1738
        %v1742 = vshrl.u32 2475754826, %v1739
        %v1743 = vor.u32 %v1741, %v1742
        %v1744 = vshll.u32 2475754826, %v1738
        %v1745 = vshrl.u32 2131351028, %v1739
        %v1746 = vor.u32 %v1744, %v1745
        %v1747 = vshll.u32 2131351028, %v1738
        %v1748 = vshrl.u32 2102212464, %v1739
        %v1749 = vor.u32 %v1747, %v1748
        %v1750 = vshll.u32 2102212464, %v1738
        %v1751 = vshrl.u32 920167782, %v1739
        %v1752 = vor.u32 %v1750, %v1751
        %v1753 = vshll.u32 920167782, %v1738
        %v1754 = vshrl.u32 1326507024, %v1739
        %v1755 = vor.u32 %v1753, %v1754
        %vm1756 = vcmp.lt.s32.totalorder %v1737, 1
        %vm1757 = vcmp.lt.s32.totalorder %v1737, 2
        %vm1758 = vcmp.lt.s32.totalorder %v1737, 3
        %vm1759 = vcmp.lt.s32.totalorder %v1737, 4
        %v1760 = vsel %vm1756, %v1740, %v1743
        %v1761 = vsel %vm1759, %v1749, 2102212464
        %v1762 = vsel %vm1758, %v1746, %v1761
        %v1763 = vsel %vm1757, %v1760, %v1762
        %v1764 = vsel %vm1756, %v1743, %v1746
        %v1765 = vsel %vm1759, %v1752, 920167782
        %v1766 = vsel %vm1758, %v1749, %v1765
        %v1767 = vsel %vm1757, %v1764, %v1766
        %v1768 = vsel %vm1756, %v1746, %v1749
        %v1769 = vsel %vm1759, %v1755, 1326507024
        %v1770 = vsel %vm1758, %v1752, %v1769
        %v1771 = vsel %vm1757, %v1768, %v1770
        %v1772 = vshll.u32 %v1732, 8
        %v1773 = vmul.u32.u64.compose %v1772, %v1771
        %v1774 = vextract.low.u32 %v1773
        %v1775 = vextract.high.u32 %v1773
        %v1776 = vmul.u32.u64.compose %v1772, %v1767
        %v1777 = vextract.low.u32 %v1776
        %v1778 = vextract.high.u32 %v1776
        %v1779 = vmul.u32 %v1772, %v1763
        %v1780 = vadd.s32 %v1775, %v1777
        %vm1781 = vc.u32 %v1775, %v1777
        %v1782 = vadd.s32 %v1778, 1
        %v1783 = vsel %vm1781, %v1782, %v1778
        %v1784 = vadd.s32 %v1779, %v1783
        %v1785 = vadd.s32 %v1784, 536870912
        %v1786 = vshrl.u32 %v1785, 30
        %v1787 = vshll.u32 %v1786, 30
        %v1788 = vsub.s32 %v1784, %v1787
        %vm1789 = vcmp.lt.s32.totalorder %v1788, 0
        %v1790 = vsub.s32 0, %v1788
        %v1791 = vsel %vm1789, %v1790, %v1788
        %v1792 = vclz %v1791
        %v1793 = vsub.s32 %v1792, 2
        %vm1794 = vcmp.gt.s32.totalorder 0, %v1793
        %v1795 = vsel %vm1794, 0, %v1793
        %v1796 = vsub.s32 32, %v1795
        %v1797 = vshll.u32 %v1788, %v1795
        %v1798 = vshrl.u32 %v1780, %v1796
        %v1799 = vor.u32 %v1797, %v1798
        %v1800 = vsub.s32 4294967266, %v1795
        %v1801 = vadd.s32 %v1800, 127
        %v1802 = vshll.u32 %v1801, 23
        %v1803 = vor.u32 4788187, %v1802
        %v1804 = vand.u32 2147483647, %v1803
        %v1806 = vcvt.s32.f32 %v1799
        %v1807 = vmul.f32 %v1806, %v1804
        %v1808 = vxor.u32 %v1807, 2147483648
        %v1809 = vsel %vm1726, %v1808, %v1807
        %v1810 = vsub.s32 4, %v1786
        %v1811 = vsel %vm1726, %v1810, %v1786
        %v1812 = vsel %vm1725, %v1504, %v1809
        %v1813 = vsel %vm1725, 0, %v1811
        %v1814 = vcosq.f32.pop %v1812
        %v1815 = vsinq.f32.pop %v1812
        %vm1816 = vweird.f32 %v1504
        %v1817 = vand.u32 %v1813, 3
        %vm1818 = vcmp.lt.s32.totalorder %v1817, 2
        %vm1819 = vcmp.eq.s32.totalorder %v1817, 0
        %v1820 = vxor.u32 %v1815, 2147483648
        %v1821 = vsel %vm1819, %v1814, %v1820
        %vm1822 = vcmp.eq.s32.totalorder %v1817, 2
        %v1823 = vxor.u32 %v1814, 2147483648
        %v1824 = vsel %vm1822, %v1823, %v1815
        %v1825 = vsel %vm1818, %v1821, %v1824
        %v1826 = vsel %vm1816, nan, %v1825
        %v1827 = vand.u32 2147483647, %v1505
        %vm1828 = vcmp.le.f32.partialorder %v1827, 0.7853982
        %vm1829 = vcmp.lt.s32.totalorder %v1505, 0
        %v1830 = vand.u32 %v1505, 2139095040
        %v1831 = vshrl.u32 %v1830, 23
        %v1832 = vsub.s32 %v1831, 127
        %v1833 = vand.u32 2147483647, %v1505
        %v1834 = vand.u32 %v1833, 8388607
        %v1835 = vor.u32 %v1834, 8388608
        %v1836 = vsub.s32 0, %v1835
        %v1837 = vadd.s32 %v1832, 1
        %vm1838 = vcmp.gt.s32.totalorder %v1837, 0
        %v1839 = vsel %vm1838, %v1837, 0
        %v1840 = vshrl.u32 %v1839, 5
        %v1841 = vand.u32 %v1839, 31
        %v1842 = vsub.s32 32, %v1841
        %v1843 = vshrl.u32 683565275, %v1842
        %v1844 = vshll.u32 683565275, %v1841
        %v1845 = vshrl.u32 2475754826, %v1842
        %v1846 = vor.u32 %v1844, %v1845
        %v1847 = vshll.u32 2475754826, %v1841
        %v1848 = vshrl.u32 2131351028, %v1842
        %v1849 = vor.u32 %v1847, %v1848
        %v1850 = vshll.u32 2131351028, %v1841
        %v1851 = vshrl.u32 2102212464, %v1842
        %v1852 = vor.u32 %v1850, %v1851
        %v1853 = vshll.u32 2102212464, %v1841
        %v1854 = vshrl.u32 920167782, %v1842
        %v1855 = vor.u32 %v1853, %v1854
        %v1856 = vshll.u32 920167782, %v1841
        %v1857 = vshrl.u32 1326507024, %v1842
        %v1858 = vor.u32 %v1856, %v1857
        %vm1859 = vcmp.lt.s32.totalorder %v1840, 1
        %vm1860 = vcmp.lt.s32.totalorder %v1840, 2
        %vm1861 = vcmp.lt.s32.totalorder %v1840, 3
        %vm1862 = vcmp.lt.s32.totalorder %v1840, 4
        %v1863 = vsel %vm1859, %v1843, %v1846
        %v1864 = vsel %vm1862, %v1852, 2102212464
        %v1865 = vsel %vm1861, %v1849, %v1864
        %v1866 = vsel %vm1860, %v1863, %v1865
        %v1867 = vsel %vm1859, %v1846, %v1849
        %v1868 = vsel %vm1862, %v1855, 920167782
        %v1869 = vsel %vm1861, %v1852, %v1868
        %v1870 = vsel %vm1860, %v1867, %v1869
        %v1871 = vsel %vm1859, %v1849, %v1852
        %v1872 = vsel %vm1862, %v1858, 1326507024
        %v1873 = vsel %vm1861, %v1855, %v1872
        %v1874 = vsel %vm1860, %v1871, %v1873
        %v1875 = vshll.u32 %v1835, 8
        %v1876 = vmul.u32.u64.compose %v1875, %v1874
        %v1877 = vextract.low.u32 %v1876
        %v1878 = vextract.high.u32 %v1876
        %v1879 = vmul.u32.u64.compose %v1875, %v1870
        %v1880 = vextract.low.u32 %v1879
        %v1881 = vextract.high.u32 %v1879
        %v1882 = vmul.u32 %v1875, %v1866
        %v1883 = vadd.s32 %v1878, %v1880
        %vm1884 = vc.u32 %v1878, %v1880
        %v1885 = vadd.s32 %v1881, 1
        %v1886 = vsel %vm1884, %v1885, %v1881
        %v1887 = vadd.s32 %v1882, %v1886
        %v1888 = vadd.s32 %v1887, 536870912
        %v1889 = vshrl.u32 %v1888, 30
        %v1890 = vshll.u32 %v1889, 30
        %v1891 = vsub.s32 %v1887, %v1890
        %vm1892 = vcmp.lt.s32.totalorder %v1891, 0
        %v1893 = vsub.s32 0, %v1891
        %v1894 = vsel %vm1892, %v1893, %v1891
        %v1895 = vclz %v1894
        %v1896 = vsub.s32 %v1895, 2
        %vm1897 = vcmp.gt.s32.totalorder 0, %v1896
        %v1898 = vsel %vm1897, 0, %v1896
        %v1899 = vsub.s32 32, %v1898
        %v1900 = vshll.u32 %v1891, %v1898
        %v1901 = vshrl.u32 %v1883, %v1899
        %v1902 = vor.u32 %v1900, %v1901
        %v1903 = vsub.s32 4294967266, %v1898
        %v1904 = vadd.s32 %v1903, 127
        %v1905 = vshll.u32 %v1904, 23
        %v1906 = vor.u32 4788187, %v1905
        %v1907 = vand.u32 2147483647, %v1906
        %v1909 = vcvt.s32.f32 %v1902
        %v1910 = vmul.f32 %v1909, %v1907
        %v1911 = vxor.u32 %v1910, 2147483648
        %v1912 = vsel %vm1829, %v1911, %v1910
        %v1913 = vsub.s32 4, %v1889
        %v1914 = vsel %vm1829, %v1913, %v1889
        %v1915 = vsel %vm1828, %v1505, %v1912
        %v1916 = vsel %vm1828, 0, %v1914
        %v1917 = vcosq.f32.pop %v1915
        %v1918 = vsinq.f32.pop %v1915
        %vm1919 = vweird.f32 %v1505
        %v1920 = vand.u32 %v1916, 3
        %vm1921 = vcmp.lt.s32.totalorder %v1920, 2
        %vm1922 = vcmp.eq.s32.totalorder %v1920, 0
        %v1923 = vxor.u32 %v1918, 2147483648
        %v1924 = vsel %vm1922, %v1917, %v1923
        %vm1925 = vcmp.eq.s32.totalorder %v1920, 2
        %v1926 = vxor.u32 %v1917, 2147483648
        %v1927 = vsel %vm1925, %v1926, %v1918
        %v1928 = vsel %vm1921, %v1924, %v1927
        %v1929 = vsel %vm1919, nan, %v1928
        %v1930 = vmul.f32 %v1722, %v1720
        %v1931 = vmul.f32 %v1723, %v1721
        %v1932 = vmul.f32 %v1826, %v1720
        %v1933 = vmul.f32 %v1929, %v1721
        %v1934 = vsub.f32 %v1930, %v1932
        %v1935 = vsub.f32 %v1931, %v1933
        %v1936 = vmul.f32 %v1720, 3.0
        %v1937 = vmul.f32 %v1721, 3.0
        %v1938 = vmul.f32 %v1936, %v1934
        %v1939 = vmul.f32 %v1937, %v1935
        %v1940 = vsub.f32 %v1938, %v1722
        %v1941 = vsub.f32 %v1939, %v1723
        %1943 = vset.pattern.permute.xlu0 0
        %1944 = vperm.xlu0 %1943, %v305
        %v1945 = vpop.permute.xlu0 %1944
        %v1947 = vmul.f32 %v1945, %v1940
        %v1948 = vmul.f32 %v1945, %v1941
        %v1949 = vmul.f32 %v1477, %v1947
        %v1950 = vmul.f32 %v1481, %v1948
        %v1952 = vlaneseq
        %v1953 = vshrl.u32 %v1952, 7
        %v1954 = vsub.s32 0, %v1953
        %v1955 = vrot.slane %v726, %v1954
        %v1956 = vlaneseq
        %v1957 = vshrl.u32 %v1956, 7
        %v1958 = vsub.s32 1, %v1957
        %v1959 = vrot.slane %v726, %v1958
        %v1962 = vmul.f32 %v1955, %v1947
        %v1963 = vmul.f32 %v1959, %v1948
        %v1965 = vlaneseq
        %v1966 = vshrl.u32 %v1965, 7
        %v1967 = vsub.s32 0, %v1966
        %v1968 = vrot.slane %v734, %v1967
        %v1969 = vlaneseq
        %v1970 = vshrl.u32 %v1969, 7
        %v1971 = vsub.s32 1, %v1970
        %v1972 = vrot.slane %v734, %v1971
        %v1975 = vmul.f32 %v1968, %v1947
        %v1976 = vmul.f32 %v1972, %v1948
        %v1978 = vlaneseq
        %v1979 = vshrl.u32 %v1978, 7
        %v1980 = vsub.s32 0, %v1979
        %v1981 = vrot.slane %v744, %v1980
        %v1982 = vlaneseq
        %v1983 = vshrl.u32 %v1982, 7
        %v1984 = vsub.s32 1, %v1983
        %v1985 = vrot.slane %v744, %v1984
        %v1988 = vmul.f32 %v1981, %v1947
        %v1989 = vmul.f32 %v1985, %v1948
        %v1992 = vrot.slane %v1471, 2
        %v1993 = vrot.slane %v1472, 2
        %v1998 = vrot.slane %v1949, 4
        %v1999 = vrot.slane %v1950, 4
        %vm2002 = vcmask 1045504
        %v2003 = vsel %vm2002, %v988, %v1992
        %v2004 = vsel %vm2002, %v989, %v1993
        %vm2005 = vcmask 1043456
        %v2006 = vsel %vm2005, %v1992, %v1998
        %v2007 = vsel %vm2005, %v1993, %v1999
        %2008 = vst [vmem:[%s275] sm:$0xff] %v2003
        %2009 = vst [vmem:[%s275 + $0x8] sm:$0xff] %v2004
        %2010 = vst [vmem:[%s275 + $0x10] sm:$0xff] %v2006
        %2011 = vst [vmem:[%s275 + $0x18] sm:$0xff] %v2007
        %2012 = vst [vmem:[%s275 + $0x20] sm:$0x3] %v1998
        %2013 = vst [vmem:[%s275 + $0x28] sm:$0x3] %v1999
        %v2016 = vrot.slane %v1962, 4
        %v2017 = vrot.slane %v1963, 4
        %v2022 = vrot.slane %v1001, 6
        %v2023 = vrot.slane %v1002, 6
        %v2028 = vrot.slane %v1975, 2
        %v2029 = vrot.slane %v1976, 2
        %v2034 = vrot.slane %v1014, 4
        %v2035 = vrot.slane %v1015, 4
        %v2040 = vrot.slane %v1497, 6
        %v2041 = vrot.slane %v1498, 6
        %v2044 = vsel %vm2005, %v1992, %v2016
        %v2045 = vsel %vm2005, %v1993, %v2017
        %vm2046 = vcmask 1041408
        %v2047 = vsel %vm2046, %v2016, %v2022
        %v2048 = vsel %vm2046, %v2017, %v2023
        %v2049 = vsel %vm2002, %v1484, %v2028
        %v2050 = vsel %vm2002, %v1485, %v2029
        %v2051 = vsel %vm2005, %v2028, %v2034
        %v2052 = vsel %vm2005, %v2029, %v2035
        %v2053 = vsel %vm2046, %v2034, %v2040
        %v2054 = vsel %vm2046, %v2035, %v2041
        %2055 = vst [vmem:[%s282] sm:$0xff] %v2003
        %2056 = vst [vmem:[%s282 + $0x8] sm:$0xff] %v2004
        %2057 = vst [vmem:[%s282 + $0x10] sm:$0xff] %v2044
        %2058 = vst [vmem:[%s282 + $0x18] sm:$0xff] %v2045
        %2059 = vst [vmem:[%s282 + $0x20] sm:$0xff] %v2047
        %2060 = vst [vmem:[%s282 + $0x28] sm:$0xff] %v2048
        %2061 = vst [vmem:[%s282 + $0x30] sm:$0xff] %v2049
        %2062 = vst [vmem:[%s282 + $0x38] sm:$0xff] %v2050
        %2063 = vst [vmem:[%s282 + $0x40] sm:$0xff] %v2051
        %2064 = vst [vmem:[%s282 + $0x48] sm:$0xff] %v2052
        %2065 = vst [vmem:[%s282 + $0x50] sm:$0xff] %v2053
        %2066 = vst [vmem:[%s282 + $0x58] sm:$0xff] %v2054
        %2067 = vst [vmem:[%s282 + $0x60] sm:$0x3f] %v1988
        %2068 = vst [vmem:[%s282 + $0x68] sm:$0x3f] %v1989
        %s2069 = sand.u32 %s152, 1
        %s2070 = scalar_lea.sflag [#allocation3], %s2069
        %s2071 = sand.u32 %s152, 1
        %s2072 = smul.addr %s2071, 48
        %s2073 = scalar_lea.vmem [#allocation2], %s2072
        %s2074 = sand.u32 %s178, 1
        %s2075 = scalar_lea.sflag [#allocation5], %s2074
        %s2076 = sand.u32 %s178, 1
        %s2077 = smul.addr %s2076, 112
        %s2078 = scalar_lea.vmem [#allocation4], %s2077
        // Predicated region
        $region41: #{emb_forward.3} parent=39 // pred_check
          %p2079 = pneg %p162
        $region42: #{emb_forward.3} parent=39 // pred_check_branch
          %2081 = sbr.rel (%p2079) target = $region44
        $region43: #{emb_forward.3} parent=39 // pred_region
          %s2082 = smul.u32 2, %s24
          %s2084 = ssub.s32 768, 768
          %2085 = vsyncadd %s2070, %s2084
          %s2086 = smul.addr %s2082, 128
          %s2087 = scalar_lea.hbm %s5, %s2086
          %s2088 = sshll.u32 %s2073, 4
          %s2089 = int_to_ptr.vmem [resolvable:$true] %s2088
          %2094 = dma.vmem_to_hbm [thread:$0]  %s2089, 768, %s2087, %s2070, 256, 1024, 16
        $region44: #{emb_forward.3} parent=39 // pred_fallthru
          _
        // Predicated region
        $region45: #{emb_forward.3} parent=39 // pred_check
          %p2095 = pneg %p188
        $region46: #{emb_forward.3} parent=39 // pred_check_branch
          %2097 = sbr.rel (%p2095) target = $region48
        $region47: #{emb_forward.3} parent=39 // pred_region
          %s2098 = smul.u32 2, %s24
          %s2100 = ssub.s32 1792, 1792
          %2101 = vsyncadd %s2075, %s2100
          %s2102 = smul.addr %s2098, 128
          %s2103 = scalar_lea.hbm %s6, %s2102
          %s2104 = sshll.u32 %s2078, 4
          %s2105 = int_to_ptr.vmem [resolvable:$true] %s2104
          %2110 = dma.vmem_to_hbm [thread:$0]  %s2105, 1792, %s2103, %s2075, 256, 1024, 16
        $region48: #{emb_forward.3} parent=39 // pred_fallthru
          _
      $region40: #{emb_forward.3} parent=5 // pred_fallthru
        _
      %p2111 = scmp.le.s32.totalorder 2, %s19
      // Predicated region
      $region49: #{emb_forward.3} parent=5 // pred_check
        %p2112 = pneg %p2111
      $region50: #{emb_forward.3} parent=5 // pred_check_branch
        %2114 = sbr.rel (%p2112) target = $region52
      $region51: #{emb_forward.3} parent=5 // pred_region
        %s2115 = ssub.s32 %s19, 2
        // Predicated region
        $region53: #{emb_forward.3} parent=51 // pred_check
          %p2116 = pneg %p168
        $region54: #{emb_forward.3} parent=51 // pred_check_branch
          %2118 = sbr.rel (%p2116) target = $region56
        $region55: #{emb_forward.3} parent=51 // pred_region
          %s2119 = sand.u32 %s153, 1
          %s2120 = scalar_lea.sflag [#allocation3], %s2119
          %s2121 = sand.u32 %s153, 1
          %s2122 = smul.addr %s2121, 48
          %s2123 = scalar_lea.vmem [#allocation2], %s2122
          %2124 = dma.done %s2120, 768
        $region56: #{emb_forward.3} parent=51 // pred_fallthru
          _
        // Predicated region
        $region57: #{emb_forward.3} parent=51 // pred_check
          %p2125 = pneg %p194
        $region58: #{emb_forward.3} parent=51 // pred_check_branch
          %2127 = sbr.rel (%p2125) target = $region60
        $region59: #{emb_forward.3} parent=51 // pred_region
          %s2128 = sand.u32 %s179, 1
          %s2129 = scalar_lea.sflag [#allocation5], %s2128
          %s2130 = sand.u32 %s179, 1
          %s2131 = smul.addr %s2130, 112
          %s2132 = scalar_lea.vmem [#allocation4], %s2131
          %2133 = dma.done %s2129, 1792
        $region60: #{emb_forward.3} parent=51 // pred_fallthru
          _
      $region52: #{emb_forward.3} parent=5 // pred_fallthru
        _
    $region6: #{emb_forward.3} parent=1 // loop_footer
      %s23 = sadd.s32 1, %s19
    $region7: #{emb_forward.3} parent=1 // loop_footer_branch
      %18 = sbr.rel target = $region3
    $region8: #{emb_forward.3} parent=1 // loop_exit
      _
    %2134 = vsyncpa [#allocation3], 1
    %s2135 = scalar_lea.sflag [#allocation3], 1
    %2136 = vsyncpa %s2135, 1
    %2137 = vsyncpa [#allocation5], 1
    %s2138 = scalar_lea.sflag [#allocation5], 1
    %2139 = vsyncpa %s2138, 1

</llo_original>
